<compile_context>
chip_gen: v7x
topology: tpu7x:2x2x1
jax: 0.10.0
libtpu: 0.0.40
codegen_flags: <defaults>
</compile_context>

<pallas_src>
import functools

import jax
import jax.numpy as jnp
import numpy as np
from jax.experimental import pallas as pl
from jax.experimental.pallas import tpu as pltpu


def _round_up(n, m):
    return ((n + m - 1) // m) * m


def _largest_divisor(n, cap):
    for b in range(min(n, cap), 0, -1):
        if n % b == 0:
            return b
    return 1


def _lstm_fused_kernel(xproj_ref, whh_ref, wfc_ref, bfc_ref, out_ref,
                       h_sc, c_sc, *, t_block, h_pad):
    """One grid step == `t_block` LSTM timesteps for one batch tile.

    xproj_ref : (t_block, B_blk, 4*H_pad)  precomputed x@W_ih^T + bias (gate-aligned)
    whh_ref   : (H_pad, 4*H_pad)           hidden-to-hidden weight (transposed, padded)
    wfc_ref   : (H_pad, O_pad)             fc weight (transposed, padded)
    bfc_ref   : (1, O_pad)                 fc bias (padded)
    out_ref   : (B_blk, O_pad)             final output (written on last time block)
    h_sc/c_sc : (B_blk, H_pad) f32         recurrent state carried across grid steps
    """
    t_idx = pl.program_id(1)

    @pl.when(t_idx == 0)
    def _():
        h_sc[...] = jnp.zeros_like(h_sc)
        c_sc[...] = jnp.zeros_like(c_sc)

    h = h_sc[...]
    c = c_sc[...]
    # Fully unrolled static time loop: h/c live in vregs across the block.
    for t in range(t_block):
        gates = xproj_ref[t] + jnp.dot(h, whh_ref[...],
                                       preferred_element_type=jnp.float32)
        # PyTorch gate order i, f, g, o — each gate sits in its own
        # 128-lane-aligned chunk of width H_pad.
        i_g = jax.nn.sigmoid(gates[:, 0 * h_pad:1 * h_pad])
        f_g = jax.nn.sigmoid(gates[:, 1 * h_pad:2 * h_pad])
        g_g = jnp.tanh(gates[:, 2 * h_pad:3 * h_pad])
        o_g = jax.nn.sigmoid(gates[:, 3 * h_pad:4 * h_pad])
        c = f_g * c + i_g * g_g
        h = o_g * jnp.tanh(c)
    h_sc[...] = h
    c_sc[...] = c

    @pl.when(t_idx == pl.num_programs(1) - 1)
    def _():
        out_ref[...] = (
            jnp.dot(h, wfc_ref[...], preferred_element_type=jnp.float32)
            + bfc_ref[...]
        ).astype(out_ref.dtype)


def lstm_model_forward(x_btd, params, *, t_block=None):
    """Pallas equivalent of LSTMModel.forward.

    x_btd: (B, T, D) float32 (batch_first, like the PyTorch module)
    params: dict with w_ih (4H,D), w_hh (4H,H), b_ih (4H,), b_hh (4H,),
            w_fc (O,H), b_fc (O,)
    returns: (B, O) float32
    """
    B, T, D = x_btd.shape
    w_ih, w_hh = params["w_ih"], params["w_hh"]
    b_ih, b_hh = params["b_ih"], params["b_hh"]
    w_fc, b_fc = params["w_fc"], params["b_fc"]
    H = w_hh.shape[1]
    O = w_fc.shape[0]

    # ---- padded geometry (sublane = 8, lane = 128) ----
    B_blk = min(_round_up(B, 8), 128)       # batch tile (>= 1 sublane tile)
    B_pad = _round_up(B, B_blk)
    H_pad = _round_up(H, 128)               # each gate gets a lane-aligned chunk
    O_pad = _round_up(O, 128)               # lane-dense output store
    G4 = 4 * H_pad
    if t_block is None:
        t_block = _largest_divisor(T, cap=16)
    nt = T // t_block
    nb = B_pad // B_blk

    # ---- gate-aligned zero-padded weight layouts (zeros keep padded state at 0) ----
    def pad_gate_cols(m_4h):  # (..., 4H) -> (..., 4*H_pad)
        parts = jnp.split(m_4h, 4, axis=-1)
        parts = [jnp.pad(p, [(0, 0)] * (p.ndim - 1) + [(0, H_pad - H)])
                 for p in parts]
        return jnp.concatenate(parts, axis=-1)

    wih_pad = pad_gate_cols(jnp.transpose(w_ih, (1, 0)))                 # (D, G4)
    whh_pad = pad_gate_cols(jnp.transpose(w_hh, (1, 0)))                 # (H, G4)
    whh_pad = jnp.pad(whh_pad, ((0, H_pad - H), (0, 0)))                 # (H_pad, G4)
    bias_pad = pad_gate_cols((b_ih + b_hh).reshape(1, 4 * H))            # (1, G4)
    wfc_pad = jnp.pad(jnp.transpose(w_fc, (1, 0)),
                      ((0, H_pad - H), (0, O_pad - O)))                  # (H_pad, O_pad)
    bfc_pad = jnp.pad(b_fc, (0, O_pad - O)).reshape(1, O_pad)            # (1, O_pad)

    # ---- hoisted input projection: one big MXU-friendly matmul (M = T*B_pad) ----
    x_tbd = jnp.transpose(x_btd, (1, 0, 2))                              # (T, B, D)
    x_tbd = jnp.pad(x_tbd, ((0, 0), (0, B_pad - B), (0, 0)))             # (T, B_pad, D)
    xproj = (x_tbd.reshape(T * B_pad, D) @ wih_pad + bias_pad
             ).reshape(T, B_pad, G4).astype(jnp.float32)
    # TODO(synk): for long sequences / large H, cast xproj & W_hh^T to bf16
    # (f32 accumulation) to halve DMA bytes and VMEM residency.

    # ---- explicit scoped-VMEM budget (v5e default is only 16 MiB) ----
    f32 = 4
    resident = 2 * (t_block * B_blk * G4) * f32      # xproj block, double-buffered
    resident += 2 * (H_pad * G4) * f32               # W_hh^T
    resident += 2 * (H_pad * O_pad) * f32            # W_fc^T
    resident += 2 * (8 * O_pad) * f32                # b_fc (sublane-padded)
    resident += 2 * (B_blk * O_pad) * f32            # out block
    resident += 2 * (B_blk * H_pad) * f32            # h/c scratch
    vmem_limit = int(min(max(2 * resident + (4 << 20), 16 << 20), 100 << 20))

    kernel = functools.partial(_lstm_fused_kernel, t_block=t_block, h_pad=H_pad)

    out_pad = pl.pallas_call(
        kernel,
        out_shape=jax.ShapeDtypeStruct((B_pad, O_pad), jnp.float32),
        grid_spec=pltpu.PrefetchScalarGridSpec(
            num_scalar_prefetch=0,
            grid=(nb, nt),                                   # (batch tiles, time blocks)
            in_specs=[
                pl.BlockSpec((t_block, B_blk, G4), lambda b, t: (t, b, 0)),  # xproj
                pl.BlockSpec((H_pad, G4), lambda b, t: (0, 0)),              # W_hh^T
                pl.BlockSpec((H_pad, O_pad), lambda b, t: (0, 0)),           # W_fc^T
                pl.BlockSpec((1, O_pad), lambda b, t: (0, 0)),               # b_fc
            ],
            out_specs=pl.BlockSpec((B_blk, O_pad), lambda b, t: (b, 0)),
            scratch_shapes=[
                pltpu.VMEM((B_blk, H_pad), jnp.float32),     # h state
                pltpu.VMEM((B_blk, H_pad), jnp.float32),     # c state
            ],
        ),
        compiler_params=pltpu.CompilerParams(
            dimension_semantics=("parallel", "arbitrary"),   # batch across TCs (v7x)
            vmem_limit_bytes=vmem_limit),
    )(xproj, whh_pad, wfc_pad, bfc_pad)

    return out_pad[:B, :O]


def lstm_model_reference(x_btd, params):
    """Pure-JAX reference (mirrors torch.nn.LSTM + Linear on the last step)."""
    w_ih, w_hh = params["w_ih"], params["w_hh"]
    b_ih, b_hh = params["b_ih"], params["b_hh"]
    w_fc, b_fc = params["w_fc"], params["b_fc"]
    B = x_btd.shape[0]
    H = w_hh.shape[1]

    def step(carry, x_t):
        h, c = carry
        gates = x_t @ w_ih.T + b_ih + h @ w_hh.T + b_hh
        i = jax.nn.sigmoid(gates[:, 0 * H:1 * H])
        f = jax.nn.sigmoid(gates[:, 1 * H:2 * H])
        g = jnp.tanh(gates[:, 2 * H:3 * H])
        o = jax.nn.sigmoid(gates[:, 3 * H:4 * H])
        c = f * c + i * g
        h = o * jnp.tanh(c)
        return (h, c), None

    h0 = jnp.zeros((B, H), jnp.float32)
    c0 = jnp.zeros((B, H), jnp.float32)
    (h_last, _), _ = jax.lax.scan(step, (h0, c0),
                                  jnp.transpose(x_btd, (1, 0, 2)))
    return h_last @ w_fc.T + b_fc


def init_params(key, input_dim, hidden_dim, output_dim):
    """Deterministic init matching PyTorch's U(-1/sqrt(H), 1/sqrt(H)) scheme."""
    ks = jax.random.split(key, 6)
    s = 1.0 / np.sqrt(hidden_dim)
    u = lambda k, shape: jax.random.uniform(k, shape, jnp.float32, -s, s)
    return {
        "w_ih": u(ks[0], (4 * hidden_dim, input_dim)),
        "w_hh": u(ks[1], (4 * hidden_dim, hidden_dim)),
        "b_ih": u(ks[2], (4 * hidden_dim,)),
        "b_hh": u(ks[3], (4 * hidden_dim,)),
        "w_fc": u(ks[4], (output_dim, hidden_dim)),
        "b_fc": u(ks[5], (output_dim,)),
    }


if __name__ == "__main__":
    B, T, D, H, O = 2, 8, 8, 32, 4

    key = jax.random.PRNGKey(0)
    k_x, k_p = jax.random.split(key)
    x = jax.random.normal(k_x, (B, T, D), jnp.float32)
    params = init_params(k_p, D, H, O)

    out = jax.block_until_ready(lstm_model_forward(x, params))
    ref = jax.block_until_ready(lstm_model_reference(x, params))

    assert out.shape == (B, O)
    np.testing.assert_allclose(np.asarray(out), np.asarray(ref),
                               rtol=1e-4, atol=1e-4)
    print("KERNEL_OK")
</pallas_src>

<mosaic_0001>
module attributes {stable_mosaic.version = 11 : i64} {
  func.func @_lstm_fused_kernel(%arg0: i32, %arg1: i32, %arg2: memref<8x8x512xf32, #tpu.memory_space<vmem>>, %arg3: memref<128x512xf32, #tpu.memory_space<vmem>>, %arg4: memref<128x128xf32, #tpu.memory_space<vmem>>, %arg5: memref<1x128xf32, #tpu.memory_space<vmem>>, %arg6: memref<8x128xf32, #tpu.memory_space<vmem>>, %arg7: memref<8x128xf32, #tpu.memory_space<vmem>>, %arg8: memref<8x128xf32, #tpu.memory_space<vmem>>) attributes {dimension_semantics = [#tpu.dimension_semantics<parallel>, #tpu.dimension_semantics<arbitrary>], iteration_bounds = array<i64: 1, 1>, scalar_prefetch = 0 : i64, scratch_operands = 2 : i64, tpu.core_type = #tpu.core_type<tc>, window_params = [{transform_indices = @transform_0, window_bounds = array<i64: 8, 8, 512>}, {pipeline_mode = #tpu.pipeline_mode<synchronous>, transform_indices = @transform_1, window_bounds = array<i64: 128, 512>}, {pipeline_mode = #tpu.pipeline_mode<synchronous>, transform_indices = @transform_2, window_bounds = array<i64: 128, 128>}, {pipeline_mode = #tpu.pipeline_mode<synchronous>, transform_indices = @transform_3, window_bounds = array<i64: 1, 128>}, {transform_indices = @transform_4, window_bounds = array<i64: 8, 128>}]} {
    %c0_i32 = arith.constant 0 : i32
    %0 = arith.cmpi eq, %arg1, %c0_i32 : i32
    %1 = arith.extui %0 : i1 to i32
    %c0_i32_0 = arith.constant 0 : i32
    %2 = arith.cmpi ne, %1, %c0_i32_0 : i32
    scf.if %2 {
      %cst_74 = arith.constant 0.000000e+00 : f32
      %250 = vector.broadcast %cst_74 : f32 to vector<8x128xf32>
      %c0_75 = arith.constant 0 : index
      %c0_76 = arith.constant 0 : index
      %251 = vector.load %arg7[%c0_75, %c0_76] : memref<8x128xf32, #tpu.memory_space<vmem>>, vector<8x128xf32>
      tpu.vector_store %arg7[%c0_75, %c0_76], %250 {strides = array<i32>} : memref<8x128xf32, #tpu.memory_space<vmem>>, vector<8x128xf32>,
      %cst_77 = arith.constant 0.000000e+00 : f32
      %252 = vector.broadcast %cst_77 : f32 to vector<8x128xf32>
      %c0_78 = arith.constant 0 : index
      %c0_79 = arith.constant 0 : index
      %253 = vector.load %arg8[%c0_78, %c0_79] : memref<8x128xf32, #tpu.memory_space<vmem>>, vector<8x128xf32>
      tpu.vector_store %arg8[%c0_78, %c0_79], %252 {strides = array<i32>} : memref<8x128xf32, #tpu.memory_space<vmem>>, vector<8x128xf32>,
    } else {
    }
    %c0 = arith.constant 0 : index
    %c0_1 = arith.constant 0 : index
    %3 = vector.load %arg7[%c0, %c0_1] : memref<8x128xf32, #tpu.memory_space<vmem>>, vector<8x128xf32>
    %c0_2 = arith.constant 0 : index
    %c0_3 = arith.constant 0 : index
    %4 = vector.load %arg8[%c0_2, %c0_3] : memref<8x128xf32, #tpu.memory_space<vmem>>, vector<8x128xf32>
    %c0_4 = arith.constant 0 : index
    %c0_5 = arith.constant 0 : index
    %c0_6 = arith.constant 0 : index
    %5 = vector.load %arg2[%c0_4, %c0_5, %c0_6] : memref<8x8x512xf32, #tpu.memory_space<vmem>>, vector<1x8x512xf32>
    %6 = vector.shape_cast %5 : vector<1x8x512xf32> to vector<8x512xf32>
    %c0_7 = arith.constant 0 : index
    %c0_8 = arith.constant 0 : index
    %7 = vector.load %arg3[%c0_7, %c0_8] : memref<128x512xf32, #tpu.memory_space<vmem>>, vector<128x512xf32>
    %cst = arith.constant dense<0.000000e+00> : vector<8x512xf32>
    %8 = tpu.matmul %3, %7, %cst {dimension_numbers = #tpu.dot_dimension_numbers<[1], [0], [0], [1], [0, 0, 1, 1], [], []>} : vector<8x128xf32>, vector<128x512xf32>, vector<8x512xf32> -> vector<8x512xf32>
    %9 = arith.addf %6, %8 : vector<8x512xf32>
    %10 = vector.extract_strided_slice %9 {offsets = [0, 0], sizes = [8, 128], strides = [1, 1]} : vector<8x512xf32> to vector<8x128xf32>
    %11 = arith.negf %10 : vector<8x128xf32>
    %12 = math.exp %11 : vector<8x128xf32>
    %cst_9 = arith.constant 1.000000e+00 : f32
    %13 = vector.broadcast %cst_9 : f32 to vector<8x128xf32>
    %14 = arith.addf %13, %12 : vector<8x128xf32>
    %15 = arith.divf %13, %14 : vector<8x128xf32>
    %16 = vector.extract_strided_slice %9 {offsets = [0, 128], sizes = [8, 128], strides = [1, 1]} : vector<8x512xf32> to vector<8x128xf32>
    %17 = arith.negf %16 : vector<8x128xf32>
    %18 = math.exp %17 : vector<8x128xf32>
    %cst_10 = arith.constant 1.000000e+00 : f32
    %19 = vector.broadcast %cst_10 : f32 to vector<8x128xf32>
    %20 = arith.addf %19, %18 : vector<8x128xf32>
    %21 = arith.divf %19, %20 : vector<8x128xf32>
    %22 = vector.extract_strided_slice %9 {offsets = [0, 256], sizes = [8, 128], strides = [1, 1]} : vector<8x512xf32> to vector<8x128xf32>
    %23 = math.tanh %22 : vector<8x128xf32>
    %24 = vector.extract_strided_slice %9 {offsets = [0, 384], sizes = [8, 128], strides = [1, 1]} : vector<8x512xf32> to vector<8x128xf32>
    %25 = arith.negf %24 : vector<8x128xf32>
    %26 = math.exp %25 : vector<8x128xf32>
    %cst_11 = arith.constant 1.000000e+00 : f32
    %27 = vector.broadcast %cst_11 : f32 to vector<8x128xf32>
    %28 = arith.addf %27, %26 : vector<8x128xf32>
    %29 = arith.divf %27, %28 : vector<8x128xf32>
    %30 = arith.mulf %21, %4 : vector<8x128xf32>
    %31 = arith.mulf %15, %23 : vector<8x128xf32>
    %32 = arith.addf %30, %31 : vector<8x128xf32>
    %33 = math.tanh %32 : vector<8x128xf32>
    %34 = arith.mulf %29, %33 : vector<8x128xf32>
    %c1 = arith.constant 1 : index
    %c0_12 = arith.constant 0 : index
    %c0_13 = arith.constant 0 : index
    %35 = vector.load %arg2[%c1, %c0_12, %c0_13] : memref<8x8x512xf32, #tpu.memory_space<vmem>>, vector<1x8x512xf32>
    %36 = vector.shape_cast %35 : vector<1x8x512xf32> to vector<8x512xf32>
    %c0_14 = arith.constant 0 : index
    %c0_15 = arith.constant 0 : index
    %37 = vector.load %arg3[%c0_14, %c0_15] : memref<128x512xf32, #tpu.memory_space<vmem>>, vector<128x512xf32>
    %cst_16 = arith.constant dense<0.000000e+00> : vector<8x512xf32>
    %38 = tpu.matmul %34, %37, %cst_16 {dimension_numbers = #tpu.dot_dimension_numbers<[1], [0], [0], [1], [0, 0, 1, 1], [], []>} : vector<8x128xf32>, vector<128x512xf32>, vector<8x512xf32> -> vector<8x512xf32>
    %39 = arith.addf %36, %38 : vector<8x512xf32>
    %40 = vector.extract_strided_slice %39 {offsets = [0, 0], sizes = [8, 128], strides = [1, 1]} : vector<8x512xf32> to vector<8x128xf32>
    %41 = arith.negf %40 : vector<8x128xf32>
    %42 = math.exp %41 : vector<8x128xf32>
    %cst_17 = arith.constant 1.000000e+00 : f32
    %43 = vector.broadcast %cst_17 : f32 to vector<8x128xf32>
    %44 = arith.addf %43, %42 : vector<8x128xf32>
    %45 = arith.divf %43, %44 : vector<8x128xf32>
    %46 = vector.extract_strided_slice %39 {offsets = [0, 128], sizes = [8, 128], strides = [1, 1]} : vector<8x512xf32> to vector<8x128xf32>
    %47 = arith.negf %46 : vector<8x128xf32>
    %48 = math.exp %47 : vector<8x128xf32>
    %cst_18 = arith.constant 1.000000e+00 : f32
    %49 = vector.broadcast %cst_18 : f32 to vector<8x128xf32>
    %50 = arith.addf %49, %48 : vector<8x128xf32>
    %51 = arith.divf %49, %50 : vector<8x128xf32>
    %52 = vector.extract_strided_slice %39 {offsets = [0, 256], sizes = [8, 128], strides = [1, 1]} : vector<8x512xf32> to vector<8x128xf32>
    %53 = math.tanh %52 : vector<8x128xf32>
    %54 = vector.extract_strided_slice %39 {offsets = [0, 384], sizes = [8, 128], strides = [1, 1]} : vector<8x512xf32> to vector<8x128xf32>
    %55 = arith.negf %54 : vector<8x128xf32>
    %56 = math.exp %55 : vector<8x128xf32>
    %cst_19 = arith.constant 1.000000e+00 : f32
    %57 = vector.broadcast %cst_19 : f32 to vector<8x128xf32>
    %58 = arith.addf %57, %56 : vector<8x128xf32>
    %59 = arith.divf %57, %58 : vector<8x128xf32>
    %60 = arith.mulf %51, %32 : vector<8x128xf32>
    %61 = arith.mulf %45, %53 : vector<8x128xf32>
    %62 = arith.addf %60, %61 : vector<8x128xf32>
    %63 = math.tanh %62 : vector<8x128xf32>
    %64 = arith.mulf %59, %63 : vector<8x128xf32>
    %c2 = arith.constant 2 : index
    %c0_20 = arith.constant 0 : index
    %c0_21 = arith.constant 0 : index
    %65 = vector.load %arg2[%c2, %c0_20, %c0_21] : memref<8x8x512xf32, #tpu.memory_space<vmem>>, vector<1x8x512xf32>
    %66 = vector.shape_cast %65 : vector<1x8x512xf32> to vector<8x512xf32>
    %c0_22 = arith.constant 0 : index
    %c0_23 = arith.constant 0 : index
    %67 = vector.load %arg3[%c0_22, %c0_23] : memref<128x512xf32, #tpu.memory_space<vmem>>, vector<128x512xf32>
    %cst_24 = arith.constant dense<0.000000e+00> : vector<8x512xf32>
    %68 = tpu.matmul %64, %67, %cst_24 {dimension_numbers = #tpu.dot_dimension_numbers<[1], [0], [0], [1], [0, 0, 1, 1], [], []>} : vector<8x128xf32>, vector<128x512xf32>, vector<8x512xf32> -> vector<8x512xf32>
    %69 = arith.addf %66, %68 : vector<8x512xf32>
    %70 = vector.extract_strided_slice %69 {offsets = [0, 0], sizes = [8, 128], strides = [1, 1]} : vector<8x512xf32> to vector<8x128xf32>
    %71 = arith.negf %70 : vector<8x128xf32>
    %72 = math.exp %71 : vector<8x128xf32>
    %cst_25 = arith.constant 1.000000e+00 : f32
    %73 = vector.broadcast %cst_25 : f32 to vector<8x128xf32>
    %74 = arith.addf %73, %72 : vector<8x128xf32>
    %75 = arith.divf %73, %74 : vector<8x128xf32>
    %76 = vector.extract_strided_slice %69 {offsets = [0, 128], sizes = [8, 128], strides = [1, 1]} : vector<8x512xf32> to vector<8x128xf32>
    %77 = arith.negf %76 : vector<8x128xf32>
    %78 = math.exp %77 : vector<8x128xf32>
    %cst_26 = arith.constant 1.000000e+00 : f32
    %79 = vector.broadcast %cst_26 : f32 to vector<8x128xf32>
    %80 = arith.addf %79, %78 : vector<8x128xf32>
    %81 = arith.divf %79, %80 : vector<8x128xf32>
    %82 = vector.extract_strided_slice %69 {offsets = [0, 256], sizes = [8, 128], strides = [1, 1]} : vector<8x512xf32> to vector<8x128xf32>
    %83 = math.tanh %82 : vector<8x128xf32>
    %84 = vector.extract_strided_slice %69 {offsets = [0, 384], sizes = [8, 128], strides = [1, 1]} : vector<8x512xf32> to vector<8x128xf32>
    %85 = arith.negf %84 : vector<8x128xf32>
    %86 = math.exp %85 : vector<8x128xf32>
    %cst_27 = arith.constant 1.000000e+00 : f32
    %87 = vector.broadcast %cst_27 : f32 to vector<8x128xf32>
    %88 = arith.addf %87, %86 : vector<8x128xf32>
    %89 = arith.divf %87, %88 : vector<8x128xf32>
    %90 = arith.mulf %81, %62 : vector<8x128xf32>
    %91 = arith.mulf %75, %83 : vector<8x128xf32>
    %92 = arith.addf %90, %91 : vector<8x128xf32>
    %93 = math.tanh %92 : vector<8x128xf32>
    %94 = arith.mulf %89, %93 : vector<8x128xf32>
    %c3 = arith.constant 3 : index
    %c0_28 = arith.constant 0 : index
    %c0_29 = arith.constant 0 : index
    %95 = vector.load %arg2[%c3, %c0_28, %c0_29] : memref<8x8x512xf32, #tpu.memory_space<vmem>>, vector<1x8x512xf32>
    %96 = vector.shape_cast %95 : vector<1x8x512xf32> to vector<8x512xf32>
    %c0_30 = arith.constant 0 : index
    %c0_31 = arith.constant 0 : index
    %97 = vector.load %arg3[%c0_30, %c0_31] : memref<128x512xf32, #tpu.memory_space<vmem>>, vector<128x512xf32>
    %cst_32 = arith.constant dense<0.000000e+00> : vector<8x512xf32>
    %98 = tpu.matmul %94, %97, %cst_32 {dimension_numbers = #tpu.dot_dimension_numbers<[1], [0], [0], [1], [0, 0, 1, 1], [], []>} : vector<8x128xf32>, vector<128x512xf32>, vector<8x512xf32> -> vector<8x512xf32>
    %99 = arith.addf %96, %98 : vector<8x512xf32>
    %100 = vector.extract_strided_slice %99 {offsets = [0, 0], sizes = [8, 128], strides = [1, 1]} : vector<8x512xf32> to vector<8x128xf32>
    %101 = arith.negf %100 : vector<8x128xf32>
    %102 = math.exp %101 : vector<8x128xf32>
    %cst_33 = arith.constant 1.000000e+00 : f32
    %103 = vector.broadcast %cst_33 : f32 to vector<8x128xf32>
    %104 = arith.addf %103, %102 : vector<8x128xf32>
    %105 = arith.divf %103, %104 : vector<8x128xf32>
    %106 = vector.extract_strided_slice %99 {offsets = [0, 128], sizes = [8, 128], strides = [1, 1]} : vector<8x512xf32> to vector<8x128xf32>
    %107 = arith.negf %106 : vector<8x128xf32>
    %108 = math.exp %107 : vector<8x128xf32>
    %cst_34 = arith.constant 1.000000e+00 : f32
    %109 = vector.broadcast %cst_34 : f32 to vector<8x128xf32>
    %110 = arith.addf %109, %108 : vector<8x128xf32>
    %111 = arith.divf %109, %110 : vector<8x128xf32>
    %112 = vector.extract_strided_slice %99 {offsets = [0, 256], sizes = [8, 128], strides = [1, 1]} : vector<8x512xf32> to vector<8x128xf32>
    %113 = math.tanh %112 : vector<8x128xf32>
    %114 = vector.extract_strided_slice %99 {offsets = [0, 384], sizes = [8, 128], strides = [1, 1]} : vector<8x512xf32> to vector<8x128xf32>
    %115 = arith.negf %114 : vector<8x128xf32>
    %116 = math.exp %115 : vector<8x128xf32>
    %cst_35 = arith.constant 1.000000e+00 : f32
    %117 = vector.broadcast %cst_35 : f32 to vector<8x128xf32>
    %118 = arith.addf %117, %116 : vector<8x128xf32>
    %119 = arith.divf %117, %118 : vector<8x128xf32>
    %120 = arith.mulf %111, %92 : vector<8x128xf32>
    %121 = arith.mulf %105, %113 : vector<8x128xf32>
    %122 = arith.addf %120, %121 : vector<8x128xf32>
    %123 = math.tanh %122 : vector<8x128xf32>
    %124 = arith.mulf %119, %123 : vector<8x128xf32>
    %c4 = arith.constant 4 : index
    %c0_36 = arith.constant 0 : index
    %c0_37 = arith.constant 0 : index
    %125 = vector.load %arg2[%c4, %c0_36, %c0_37] : memref<8x8x512xf32, #tpu.memory_space<vmem>>, vector<1x8x512xf32>
    %126 = vector.shape_cast %125 : vector<1x8x512xf32> to vector<8x512xf32>
    %c0_38 = arith.constant 0 : index
    %c0_39 = arith.constant 0 : index
    %127 = vector.load %arg3[%c0_38, %c0_39] : memref<128x512xf32, #tpu.memory_space<vmem>>, vector<128x512xf32>
    %cst_40 = arith.constant dense<0.000000e+00> : vector<8x512xf32>
    %128 = tpu.matmul %124, %127, %cst_40 {dimension_numbers = #tpu.dot_dimension_numbers<[1], [0], [0], [1], [0, 0, 1, 1], [], []>} : vector<8x128xf32>, vector<128x512xf32>, vector<8x512xf32> -> vector<8x512xf32>
    %129 = arith.addf %126, %128 : vector<8x512xf32>
    %130 = vector.extract_strided_slice %129 {offsets = [0, 0], sizes = [8, 128], strides = [1, 1]} : vector<8x512xf32> to vector<8x128xf32>
    %131 = arith.negf %130 : vector<8x128xf32>
    %132 = math.exp %131 : vector<8x128xf32>
    %cst_41 = arith.constant 1.000000e+00 : f32
    %133 = vector.broadcast %cst_41 : f32 to vector<8x128xf32>
    %134 = arith.addf %133, %132 : vector<8x128xf32>
    %135 = arith.divf %133, %134 : vector<8x128xf32>
    %136 = vector.extract_strided_slice %129 {offsets = [0, 128], sizes = [8, 128], strides = [1, 1]} : vector<8x512xf32> to vector<8x128xf32>
    %137 = arith.negf %136 : vector<8x128xf32>
    %138 = math.exp %137 : vector<8x128xf32>
    %cst_42 = arith.constant 1.000000e+00 : f32
    %139 = vector.broadcast %cst_42 : f32 to vector<8x128xf32>
    %140 = arith.addf %139, %138 : vector<8x128xf32>
    %141 = arith.divf %139, %140 : vector<8x128xf32>
    %142 = vector.extract_strided_slice %129 {offsets = [0, 256], sizes = [8, 128], strides = [1, 1]} : vector<8x512xf32> to vector<8x128xf32>
    %143 = math.tanh %142 : vector<8x128xf32>
    %144 = vector.extract_strided_slice %129 {offsets = [0, 384], sizes = [8, 128], strides = [1, 1]} : vector<8x512xf32> to vector<8x128xf32>
    %145 = arith.negf %144 : vector<8x128xf32>
    %146 = math.exp %145 : vector<8x128xf32>
    %cst_43 = arith.constant 1.000000e+00 : f32
    %147 = vector.broadcast %cst_43 : f32 to vector<8x128xf32>
    %148 = arith.addf %147, %146 : vector<8x128xf32>
    %149 = arith.divf %147, %148 : vector<8x128xf32>
    %150 = arith.mulf %141, %122 : vector<8x128xf32>
    %151 = arith.mulf %135, %143 : vector<8x128xf32>
    %152 = arith.addf %150, %151 : vector<8x128xf32>
    %153 = math.tanh %152 : vector<8x128xf32>
    %154 = arith.mulf %149, %153 : vector<8x128xf32>
    %c5 = arith.constant 5 : index
    %c0_44 = arith.constant 0 : index
    %c0_45 = arith.constant 0 : index
    %155 = vector.load %arg2[%c5, %c0_44, %c0_45] : memref<8x8x512xf32, #tpu.memory_space<vmem>>, vector<1x8x512xf32>
    %156 = vector.shape_cast %155 : vector<1x8x512xf32> to vector<8x512xf32>
    %c0_46 = arith.constant 0 : index
    %c0_47 = arith.constant 0 : index
    %157 = vector.load %arg3[%c0_46, %c0_47] : memref<128x512xf32, #tpu.memory_space<vmem>>, vector<128x512xf32>
    %cst_48 = arith.constant dense<0.000000e+00> : vector<8x512xf32>
    %158 = tpu.matmul %154, %157, %cst_48 {dimension_numbers = #tpu.dot_dimension_numbers<[1], [0], [0], [1], [0, 0, 1, 1], [], []>} : vector<8x128xf32>, vector<128x512xf32>, vector<8x512xf32> -> vector<8x512xf32>
    %159 = arith.addf %156, %158 : vector<8x512xf32>
    %160 = vector.extract_strided_slice %159 {offsets = [0, 0], sizes = [8, 128], strides = [1, 1]} : vector<8x512xf32> to vector<8x128xf32>
    %161 = arith.negf %160 : vector<8x128xf32>
    %162 = math.exp %161 : vector<8x128xf32>
    %cst_49 = arith.constant 1.000000e+00 : f32
    %163 = vector.broadcast %cst_49 : f32 to vector<8x128xf32>
    %164 = arith.addf %163, %162 : vector<8x128xf32>
    %165 = arith.divf %163, %164 : vector<8x128xf32>
    %166 = vector.extract_strided_slice %159 {offsets = [0, 128], sizes = [8, 128], strides = [1, 1]} : vector<8x512xf32> to vector<8x128xf32>
    %167 = arith.negf %166 : vector<8x128xf32>
    %168 = math.exp %167 : vector<8x128xf32>
    %cst_50 = arith.constant 1.000000e+00 : f32
    %169 = vector.broadcast %cst_50 : f32 to vector<8x128xf32>
    %170 = arith.addf %169, %168 : vector<8x128xf32>
    %171 = arith.divf %169, %170 : vector<8x128xf32>
    %172 = vector.extract_strided_slice %159 {offsets = [0, 256], sizes = [8, 128], strides = [1, 1]} : vector<8x512xf32> to vector<8x128xf32>
    %173 = math.tanh %172 : vector<8x128xf32>
    %174 = vector.extract_strided_slice %159 {offsets = [0, 384], sizes = [8, 128], strides = [1, 1]} : vector<8x512xf32> to vector<8x128xf32>
    %175 = arith.negf %174 : vector<8x128xf32>
    %176 = math.exp %175 : vector<8x128xf32>
    %cst_51 = arith.constant 1.000000e+00 : f32
    %177 = vector.broadcast %cst_51 : f32 to vector<8x128xf32>
    %178 = arith.addf %177, %176 : vector<8x128xf32>
    %179 = arith.divf %177, %178 : vector<8x128xf32>
    %180 = arith.mulf %171, %152 : vector<8x128xf32>
    %181 = arith.mulf %165, %173 : vector<8x128xf32>
    %182 = arith.addf %180, %181 : vector<8x128xf32>
    %183 = math.tanh %182 : vector<8x128xf32>
    %184 = arith.mulf %179, %183 : vector<8x128xf32>
    %c6 = arith.constant 6 : index
    %c0_52 = arith.constant 0 : index
    %c0_53 = arith.constant 0 : index
    %185 = vector.load %arg2[%c6, %c0_52, %c0_53] : memref<8x8x512xf32, #tpu.memory_space<vmem>>, vector<1x8x512xf32>
    %186 = vector.shape_cast %185 : vector<1x8x512xf32> to vector<8x512xf32>
    %c0_54 = arith.constant 0 : index
    %c0_55 = arith.constant 0 : index
    %187 = vector.load %arg3[%c0_54, %c0_55] : memref<128x512xf32, #tpu.memory_space<vmem>>, vector<128x512xf32>
    %cst_56 = arith.constant dense<0.000000e+00> : vector<8x512xf32>
    %188 = tpu.matmul %184, %187, %cst_56 {dimension_numbers = #tpu.dot_dimension_numbers<[1], [0], [0], [1], [0, 0, 1, 1], [], []>} : vector<8x128xf32>, vector<128x512xf32>, vector<8x512xf32> -> vector<8x512xf32>
    %189 = arith.addf %186, %188 : vector<8x512xf32>
    %190 = vector.extract_strided_slice %189 {offsets = [0, 0], sizes = [8, 128], strides = [1, 1]} : vector<8x512xf32> to vector<8x128xf32>
    %191 = arith.negf %190 : vector<8x128xf32>
    %192 = math.exp %191 : vector<8x128xf32>
    %cst_57 = arith.constant 1.000000e+00 : f32
    %193 = vector.broadcast %cst_57 : f32 to vector<8x128xf32>
    %194 = arith.addf %193, %192 : vector<8x128xf32>
    %195 = arith.divf %193, %194 : vector<8x128xf32>
    %196 = vector.extract_strided_slice %189 {offsets = [0, 128], sizes = [8, 128], strides = [1, 1]} : vector<8x512xf32> to vector<8x128xf32>
    %197 = arith.negf %196 : vector<8x128xf32>
    %198 = math.exp %197 : vector<8x128xf32>
    %cst_58 = arith.constant 1.000000e+00 : f32
    %199 = vector.broadcast %cst_58 : f32 to vector<8x128xf32>
    %200 = arith.addf %199, %198 : vector<8x128xf32>
    %201 = arith.divf %199, %200 : vector<8x128xf32>
    %202 = vector.extract_strided_slice %189 {offsets = [0, 256], sizes = [8, 128], strides = [1, 1]} : vector<8x512xf32> to vector<8x128xf32>
    %203 = math.tanh %202 : vector<8x128xf32>
    %204 = vector.extract_strided_slice %189 {offsets = [0, 384], sizes = [8, 128], strides = [1, 1]} : vector<8x512xf32> to vector<8x128xf32>
    %205 = arith.negf %204 : vector<8x128xf32>
    %206 = math.exp %205 : vector<8x128xf32>
    %cst_59 = arith.constant 1.000000e+00 : f32
    %207 = vector.broadcast %cst_59 : f32 to vector<8x128xf32>
    %208 = arith.addf %207, %206 : vector<8x128xf32>
    %209 = arith.divf %207, %208 : vector<8x128xf32>
    %210 = arith.mulf %201, %182 : vector<8x128xf32>
    %211 = arith.mulf %195, %203 : vector<8x128xf32>
    %212 = arith.addf %210, %211 : vector<8x128xf32>
    %213 = math.tanh %212 : vector<8x128xf32>
    %214 = arith.mulf %209, %213 : vector<8x128xf32>
    %c7 = arith.constant 7 : index
    %c0_60 = arith.constant 0 : index
    %c0_61 = arith.constant 0 : index
    %215 = vector.load %arg2[%c7, %c0_60, %c0_61] : memref<8x8x512xf32, #tpu.memory_space<vmem>>, vector<1x8x512xf32>
    %216 = vector.shape_cast %215 : vector<1x8x512xf32> to vector<8x512xf32>
    %c0_62 = arith.constant 0 : index
    %c0_63 = arith.constant 0 : index
    %217 = vector.load %arg3[%c0_62, %c0_63] : memref<128x512xf32, #tpu.memory_space<vmem>>, vector<128x512xf32>
    %cst_64 = arith.constant dense<0.000000e+00> : vector<8x512xf32>
    %218 = tpu.matmul %214, %217, %cst_64 {dimension_numbers = #tpu.dot_dimension_numbers<[1], [0], [0], [1], [0, 0, 1, 1], [], []>} : vector<8x128xf32>, vector<128x512xf32>, vector<8x512xf32> -> vector<8x512xf32>
    %219 = arith.addf %216, %218 : vector<8x512xf32>
    %220 = vector.extract_strided_slice %219 {offsets = [0, 0], sizes = [8, 128], strides = [1, 1]} : vector<8x512xf32> to vector<8x128xf32>
    %221 = arith.negf %220 : vector<8x128xf32>
    %222 = math.exp %221 : vector<8x128xf32>
    %cst_65 = arith.constant 1.000000e+00 : f32
    %223 = vector.broadcast %cst_65 : f32 to vector<8x128xf32>
    %224 = arith.addf %223, %222 : vector<8x128xf32>
    %225 = arith.divf %223, %224 : vector<8x128xf32>
    %226 = vector.extract_strided_slice %219 {offsets = [0, 128], sizes = [8, 128], strides = [1, 1]} : vector<8x512xf32> to vector<8x128xf32>
    %227 = arith.negf %226 : vector<8x128xf32>
    %228 = math.exp %227 : vector<8x128xf32>
    %cst_66 = arith.constant 1.000000e+00 : f32
    %229 = vector.broadcast %cst_66 : f32 to vector<8x128xf32>
    %230 = arith.addf %229, %228 : vector<8x128xf32>
    %231 = arith.divf %229, %230 : vector<8x128xf32>
    %232 = vector.extract_strided_slice %219 {offsets = [0, 256], sizes = [8, 128], strides = [1, 1]} : vector<8x512xf32> to vector<8x128xf32>
    %233 = math.tanh %232 : vector<8x128xf32>
    %234 = vector.extract_strided_slice %219 {offsets = [0, 384], sizes = [8, 128], strides = [1, 1]} : vector<8x512xf32> to vector<8x128xf32>
    %235 = arith.negf %234 : vector<8x128xf32>
    %236 = math.exp %235 : vector<8x128xf32>
    %cst_67 = arith.constant 1.000000e+00 : f32
    %237 = vector.broadcast %cst_67 : f32 to vector<8x128xf32>
    %238 = arith.addf %237, %236 : vector<8x128xf32>
    %239 = arith.divf %237, %238 : vector<8x128xf32>
    %240 = arith.mulf %231, %212 : vector<8x128xf32>
    %241 = arith.mulf %225, %233 : vector<8x128xf32>
    %242 = arith.addf %240, %241 : vector<8x128xf32>
    %243 = math.tanh %242 : vector<8x128xf32>
    %244 = arith.mulf %239, %243 : vector<8x128xf32>
    %c0_68 = arith.constant 0 : index
    %c0_69 = arith.constant 0 : index
    %245 = vector.load %arg7[%c0_68, %c0_69] : memref<8x128xf32, #tpu.memory_space<vmem>>, vector<8x128xf32>
    tpu.vector_store %arg7[%c0_68, %c0_69], %244 {strides = array<i32>} : memref<8x128xf32, #tpu.memory_space<vmem>>, vector<8x128xf32>,
    %c0_70 = arith.constant 0 : index
    %c0_71 = arith.constant 0 : index
    %246 = vector.load %arg8[%c0_70, %c0_71] : memref<8x128xf32, #tpu.memory_space<vmem>>, vector<8x128xf32>
    tpu.vector_store %arg8[%c0_70, %c0_71], %242 {strides = array<i32>} : memref<8x128xf32, #tpu.memory_space<vmem>>, vector<8x128xf32>,
    %c0_i32_72 = arith.constant 0 : i32
    %247 = arith.cmpi eq, %arg1, %c0_i32_72 : i32
    %248 = arith.extui %247 : i1 to i32
    %c0_i32_73 = arith.constant 0 : i32
    %249 = arith.cmpi ne, %248, %c0_i32_73 : i32
    scf.if %249 {
      %c0_74 = arith.constant 0 : index
      %c0_75 = arith.constant 0 : index
      %250 = vector.load %arg4[%c0_74, %c0_75] : memref<128x128xf32, #tpu.memory_space<vmem>>, vector<128x128xf32>
      %cst_76 = arith.constant dense<0.000000e+00> : vector<8x128xf32>
      %251 = tpu.matmul %244, %250, %cst_76 {dimension_numbers = #tpu.dot_dimension_numbers<[1], [0], [0], [1], [0, 0, 1, 1], [], []>} : vector<8x128xf32>, vector<128x128xf32>, vector<8x128xf32> -> vector<8x128xf32>
      %c0_77 = arith.constant 0 : index
      %c0_78 = arith.constant 0 : index
      %252 = vector.load %arg5[%c0_77, %c0_78] : memref<1x128xf32, #tpu.memory_space<vmem>>, vector<1x128xf32>
      %253 = vector.broadcast %252 : vector<1x128xf32> to vector<8x128xf32>
      %254 = arith.addf %251, %253 : vector<8x128xf32>
      %c0_79 = arith.constant 0 : index
      %c0_80 = arith.constant 0 : index
      %255 = vector.load %arg6[%c0_79, %c0_80] : memref<8x128xf32, #tpu.memory_space<vmem>>, vector<8x128xf32>
      tpu.vector_store %arg6[%c0_79, %c0_80], %254 {strides = array<i32>} : memref<8x128xf32, #tpu.memory_space<vmem>>, vector<8x128xf32>,
    } else {
    }
    return
  }
  func.func @transform_0(%arg0: i32, %arg1: i32) -> (i32, i32, i32) {
    %c0_i32 = arith.constant 0 : i32
    %c0_i32_0 = arith.constant 0 : i32
    return %arg1, %arg0, %c0_i32 : i32, i32, i32
  }
  func.func @transform_1(%arg0: i32, %arg1: i32) -> (i32, i32) {
    %c0_i32 = arith.constant 0 : i32
    %c0_i32_0 = arith.constant 0 : i32
    %c0_i32_1 = arith.constant 0 : i32
    return %c0_i32, %c0_i32_0 : i32, i32
  }
  func.func @transform_2(%arg0: i32, %arg1: i32) -> (i32, i32) {
    %c0_i32 = arith.constant 0 : i32
    %c0_i32_0 = arith.constant 0 : i32
    %c0_i32_1 = arith.constant 0 : i32
    return %c0_i32, %c0_i32_0 : i32, i32
  }
  func.func @transform_3(%arg0: i32, %arg1: i32) -> (i32, i32) {
    %c0_i32 = arith.constant 0 : i32
    %c0_i32_0 = arith.constant 0 : i32
    %c0_i32_1 = arith.constant 0 : i32
    return %c0_i32, %c0_i32_0 : i32, i32
  }
  func.func @transform_4(%arg0: i32, %arg1: i32) -> (i32, i32) {
    %c0_i32 = arith.constant 0 : i32
    %c0_i32_0 = arith.constant 0 : i32
    return %arg0, %c0_i32 : i32, i32
  }
}

</mosaic_0001>

<llo_original>
// kernel: tpu_custom_call.1
$region0: #{tpu_custom_call.1}
  #allocation0 [shape = 'u32[]', space=smem, size = 0x4, offset = 0x4, fixed_abs, tag = 'smem constant byte address 0x4 - core index']
  #allocation1 [shape = 'u32[144,128]{1,0:T(1,128)}', space=vmem, size = 0x12000, scoped, tag = 'internal scratch']
  #allocation2 [shape = 'f32[8,128]{1,0:T(8,128)}', space=vmem, size = 0x1000, scoped, tag = 'scratch operand']
  #allocation3 [shape = 'f32[8,128]{1,0:T(8,128)}', space=vmem, size = 0x1000, scoped, tag = 'scratch operand']
  %s0 = inlined_call_operand.hbm [shape: f32[8,8,512], index: 0, kind: input, shape index: {}]
  %s1 = inlined_call_operand.hbm [shape: f32[128,512], index: 1, kind: input, shape index: {}]
  %s2 = inlined_call_operand.hbm [shape: f32[128,128], index: 2, kind: input, shape index: {}]
  %s3 = inlined_call_operand.vmem [shape: f32[1,128], index: 3, kind: input, shape index: {}]
  %s4 = inlined_call_operand.hbm [shape: f32[8,128], index: 4, kind: output, shape index: {}]
  %s5 = sld [smem:[#allocation0]]
  $region46: #{tpu_custom_call.1} parent=0
    _
  %s7 = ssub.s32 1, %s5
  %s8 = scalar_select 0, %s7, %s5
  $region1: #{tpu_custom_call.1} parent=0
    #allocation4 [shape = 'u8[131072]{0}', space=vmem, size = 0x20000, scoped, tag = 'input window, operand 0, single buffered']
    #allocation5 [shape = 's32[1]{0}', space=sflag, size = 0x4, scoped, tag = 'scoped memory for tpu_custom_call.1']
    #allocation6 [shape = 's32[1]{0}', space=sflag, size = 0x4, scoped, tag = 'scoped memory for tpu_custom_call.1']
    #allocation7 [shape = 'u8[262144]{0}', space=vmem, size = 0x40000, scoped, tag = 'input window, operand 1, single buffered']
    #allocation8 [shape = 's32[1]{0}', space=sflag, size = 0x4, scoped, tag = 'scoped memory for tpu_custom_call.1']
    #allocation9 [shape = 'u8[65536]{0}', space=vmem, size = 0x10000, scoped, tag = 'input window, operand 2, single buffered']
    #allocation10 [shape = 'u8[4096]{0}', space=vmem, size = 0x1000, scoped, tag = 'output window, operand 0, single buffered']
    %9 = vsyncpa [#allocation5], 0
    %10 = vsyncpa [#allocation8], 0
    %11 = vsyncpa [#allocation6], 0
    // Predicated region
    $region2: #{tpu_custom_call.1} parent=1 // pred_check
      _
    $region3: #{tpu_custom_call.1} parent=1 // pred_check_branch
      %13 = sbr.rel (0) target = $region5
    $region4: #{tpu_custom_call.1} parent=1 // pred_region
      %s15 = ssub.s32 4096, 4096
      %16 = vsyncadd [#allocation5], %s15
      %s17 = sshll.u32 [#allocation4], 4
      %s18 = int_to_ptr.vmem [resolvable:$true] %s17
      %23 = dma.hbm_to_vmem [thread:$0]  %s0, 4096, %s18, [#allocation5], 512, 512, 32
    $region5: #{tpu_custom_call.1} parent=1 // pred_fallthru
      _
    // Predicated region
    $region6: #{tpu_custom_call.1} parent=1 // pred_check
      _
    $region7: #{tpu_custom_call.1} parent=1 // pred_check_branch
      %25 = sbr.rel (0) target = $region9
    $region8: #{tpu_custom_call.1} parent=1 // pred_region
      %s27 = ssub.s32 8192, 8192
      %28 = vsyncadd [#allocation8], %s27
      %s29 = sshll.u32 [#allocation7], 4
      %s30 = int_to_ptr.vmem [resolvable:$true] %s29
      %35 = dma.hbm_to_vmem [thread:$0]  %s1, 8192, %s30, [#allocation8], 512, 512, 32
    $region9: #{tpu_custom_call.1} parent=1 // pred_fallthru
      _
    // Predicated region
    $region10: #{tpu_custom_call.1} parent=1 // pred_check
      _
    $region11: #{tpu_custom_call.1} parent=1 // pred_check_branch
      %37 = sbr.rel (0) target = $region13
    $region12: #{tpu_custom_call.1} parent=1 // pred_region
      %s39 = ssub.s32 2048, 2048
      %40 = vsyncadd [#allocation8], %s39
      %s41 = sshll.u32 [#allocation9], 4
      %s42 = int_to_ptr.vmem [resolvable:$true] %s41
      %47 = dma.hbm_to_vmem [thread:$0]  %s2, 2048, %s42, [#allocation8], 128, 128, 8
    $region13: #{tpu_custom_call.1} parent=1 // pred_fallthru
      _
    // Predicated region
    $region14: #{tpu_custom_call.1} parent=1 // pred_check
      _
    $region15: #{tpu_custom_call.1} parent=1 // pred_check_branch
      %49 = sbr.rel (0) target = $region17
    $region16: #{tpu_custom_call.1} parent=1 // pred_region
      _
    $region17: #{tpu_custom_call.1} parent=1 // pred_fallthru
      _
    // Predicated region
    $region18: #{tpu_custom_call.1} parent=1 // pred_check
      _
    $region19: #{tpu_custom_call.1} parent=1 // pred_check_branch
      %51 = sbr.rel (0) target = $region21
    $region20: #{tpu_custom_call.1} parent=1 // pred_region
      %52 = dma.done [#allocation5], 4096
    $region21: #{tpu_custom_call.1} parent=1 // pred_fallthru
      _
    // Predicated region
    $region22: #{tpu_custom_call.1} parent=1 // pred_check
      _
    $region23: #{tpu_custom_call.1} parent=1 // pred_check_branch
      %54 = sbr.rel (0) target = $region25
    $region24: #{tpu_custom_call.1} parent=1 // pred_region
      %55 = dma.done [#allocation8], 8192
    $region25: #{tpu_custom_call.1} parent=1 // pred_fallthru
      _
    // Predicated region
    $region26: #{tpu_custom_call.1} parent=1 // pred_check
      _
    $region27: #{tpu_custom_call.1} parent=1 // pred_check_branch
      %57 = sbr.rel (0) target = $region29
    $region28: #{tpu_custom_call.1} parent=1 // pred_region
      %58 = dma.done [#allocation8], 2048
    $region29: #{tpu_custom_call.1} parent=1 // pred_fallthru
      _
    %p59 = scmp.eq.s32.totalorder 0, 0
    // Predicated region
    $region30: #{tpu_custom_call.1} parent=1 // pred_check
      %p60 = pneg %p59
    $region31: #{tpu_custom_call.1} parent=1 // pred_check_branch
      %62 = sbr.rel (%p60) target = $region33
    $region32: #{tpu_custom_call.1} parent=1 // pred_region
      %63 = vst [vmem:[#allocation2] sm:$0xff] 0.0
      %64 = vst [vmem:[#allocation3] sm:$0xff] 0.0
    $region33: #{tpu_custom_call.1} parent=1 // pred_fallthru
      _
    %v65 = vld [vmem:[#allocation2] sm:$0xff]
    %v66 = vld [vmem:[#allocation3] sm:$0xff]
    %v67 = vld [vmem:[#allocation4] sm:$0xff]
    %v68 = vld [vmem:[#allocation4 + $0x8] sm:$0xff]
    %v69 = vld [vmem:[#allocation4 + $0x10] sm:$0xff]
    %v70 = vld [vmem:[#allocation4 + $0x18] sm:$0xff]
    %v71 = vld [vmem:[#allocation7] sm:$0xff]
    %v72 = vld [vmem:[#allocation7 + $0x8] sm:$0xff]
    %v73 = vld [vmem:[#allocation7 + $0x10] sm:$0xff]
    %v74 = vld [vmem:[#allocation7 + $0x18] sm:$0xff]
    %v75 = vld [vmem:[#allocation7 + $0x20] sm:$0xff]
    %v76 = vld [vmem:[#allocation7 + $0x28] sm:$0xff]
    %v77 = vld [vmem:[#allocation7 + $0x30] sm:$0xff]
    %v78 = vld [vmem:[#allocation7 + $0x38] sm:$0xff]
    %v79 = vld [vmem:[#allocation7 + $0x40] sm:$0xff]
    %v80 = vld [vmem:[#allocation7 + $0x48] sm:$0xff]
    %v81 = vld [vmem:[#allocation7 + $0x50] sm:$0xff]
    %v82 = vld [vmem:[#allocation7 + $0x58] sm:$0xff]
    %v83 = vld [vmem:[#allocation7 + $0x60] sm:$0xff]
    %v84 = vld [vmem:[#allocation7 + $0x68] sm:$0xff]
    %v85 = vld [vmem:[#allocation7 + $0x70] sm:$0xff]
    %v86 = vld [vmem:[#allocation7 + $0x78] sm:$0xff]
    %v87 = vld [vmem:[#allocation7 + $0x80] sm:$0xff]
    %v88 = vld [vmem:[#allocation7 + $0x88] sm:$0xff]
    %v89 = vld [vmem:[#allocation7 + $0x90] sm:$0xff]
    %v90 = vld [vmem:[#allocation7 + $0x98] sm:$0xff]
    %v91 = vld [vmem:[#allocation7 + $0xa0] sm:$0xff]
    %v92 = vld [vmem:[#allocation7 + $0xa8] sm:$0xff]
    %v93 = vld [vmem:[#allocation7 + $0xb0] sm:$0xff]
    %v94 = vld [vmem:[#allocation7 + $0xb8] sm:$0xff]
    %v95 = vld [vmem:[#allocation7 + $0xc0] sm:$0xff]
    %v96 = vld [vmem:[#allocation7 + $0xc8] sm:$0xff]
    %v97 = vld [vmem:[#allocation7 + $0xd0] sm:$0xff]
    %v98 = vld [vmem:[#allocation7 + $0xd8] sm:$0xff]
    %v99 = vld [vmem:[#allocation7 + $0xe0] sm:$0xff]
    %v100 = vld [vmem:[#allocation7 + $0xe8] sm:$0xff]
    %v101 = vld [vmem:[#allocation7 + $0xf0] sm:$0xff]
    %v102 = vld [vmem:[#allocation7 + $0xf8] sm:$0xff]
    %v103 = vld [vmem:[#allocation7 + $0x100] sm:$0xff]
    %v104 = vld [vmem:[#allocation7 + $0x108] sm:$0xff]
    %v105 = vld [vmem:[#allocation7 + $0x110] sm:$0xff]
    %v106 = vld [vmem:[#allocation7 + $0x118] sm:$0xff]
    %v107 = vld [vmem:[#allocation7 + $0x120] sm:$0xff]
    %v108 = vld [vmem:[#allocation7 + $0x128] sm:$0xff]
    %v109 = vld [vmem:[#allocation7 + $0x130] sm:$0xff]
    %v110 = vld [vmem:[#allocation7 + $0x138] sm:$0xff]
    %v111 = vld [vmem:[#allocation7 + $0x140] sm:$0xff]
    %v112 = vld [vmem:[#allocation7 + $0x148] sm:$0xff]
    %v113 = vld [vmem:[#allocation7 + $0x150] sm:$0xff]
    %v114 = vld [vmem:[#allocation7 + $0x158] sm:$0xff]
    %v115 = vld [vmem:[#allocation7 + $0x160] sm:$0xff]
    %v116 = vld [vmem:[#allocation7 + $0x168] sm:$0xff]
    %v117 = vld [vmem:[#allocation7 + $0x170] sm:$0xff]
    %v118 = vld [vmem:[#allocation7 + $0x178] sm:$0xff]
    %v119 = vld [vmem:[#allocation7 + $0x180] sm:$0xff]
    %v120 = vld [vmem:[#allocation7 + $0x188] sm:$0xff]
    %v121 = vld [vmem:[#allocation7 + $0x190] sm:$0xff]
    %v122 = vld [vmem:[#allocation7 + $0x198] sm:$0xff]
    %v123 = vld [vmem:[#allocation7 + $0x1a0] sm:$0xff]
    %v124 = vld [vmem:[#allocation7 + $0x1a8] sm:$0xff]
    %v125 = vld [vmem:[#allocation7 + $0x1b0] sm:$0xff]
    %v126 = vld [vmem:[#allocation7 + $0x1b8] sm:$0xff]
    %v127 = vld [vmem:[#allocation7 + $0x1c0] sm:$0xff]
    %v128 = vld [vmem:[#allocation7 + $0x1c8] sm:$0xff]
    %v129 = vld [vmem:[#allocation7 + $0x1d0] sm:$0xff]
    %v130 = vld [vmem:[#allocation7 + $0x1d8] sm:$0xff]
    %v131 = vld [vmem:[#allocation7 + $0x1e0] sm:$0xff]
    %v132 = vld [vmem:[#allocation7 + $0x1e8] sm:$0xff]
    %v133 = vld [vmem:[#allocation7 + $0x1f0] sm:$0xff]
    %v134 = vld [vmem:[#allocation7 + $0x1f8] sm:$0xff]
    %135 = vmatprep.subr.mxu0 %v72
    %136 = vmatpush1.msra.mxu0 %v71
    %137 = vmatprep.subr.mxu0 %v76
    %138 = vmatpush1.msra.mxu0 %v75
    %139 = vmatprep.subr.mxu0 %v80
    %140 = vmatpush1.msra.mxu0 %v79
    %141 = vmatprep.subr.mxu0 %v84
    %142 = vmatpush1.msra.mxu0 %v83
    %143 = vmatprep.subr.mxu0 %v88
    %144 = vmatpush1.msra.mxu0 %v87
    %145 = vmatprep.subr.mxu0 %v92
    %146 = vmatpush1.msra.mxu0 %v91
    %147 = vmatprep.subr.mxu0 %v96
    %148 = vmatpush1.msra.mxu0 %v95
    %149 = vmatprep.subr.mxu0 %v100
    %150 = vmatpush1.msra.mxu0 %v99
    %151 = vmatprep.subr.mxu0 %v104
    %152 = vmatpush1.msra.mxu0 %v103
    %153 = vmatprep.subr.mxu0 %v108
    %154 = vmatpush1.msra.mxu0 %v107
    %155 = vmatprep.subr.mxu0 %v112
    %156 = vmatpush1.msra.mxu0 %v111
    %157 = vmatprep.subr.mxu0 %v116
    %158 = vmatpush1.msra.mxu0 %v115
    %159 = vmatprep.subr.mxu0 %v120
    %160 = vmatpush1.msra.mxu0 %v119
    %161 = vmatprep.subr.mxu0 %v124
    %162 = vmatpush1.msra.mxu0 %v123
    %163 = vmatprep.subr.mxu0 %v128
    %164 = vmatpush1.msra.mxu0 %v127
    %165 = vmatprep.subr.mxu0 %v132
    %166 = vmatpush1.msra.mxu0 %v131
    %167 = vmatprep.subr.mxu0 0.0
    %168 = vmatpush1.msra.mxu0 0.0
    %169 = vmatprep.subr.mxu0 0.0
    %170 = vmatpush1.msra.mxu0 0.0
    %171 = vmatprep.subr.mxu0 0.0
    %172 = vmatpush1.msra.mxu0 0.0
    %173 = vmatprep.subr.mxu0 0.0
    %174 = vmatpush1.msra.mxu0 0.0
    %175 = vmatprep.subr.mxu0 0.0
    %176 = vmatpush1.msra.mxu0 0.0
    %177 = vmatprep.subr.mxu0 0.0
    %178 = vmatpush1.msra.mxu0 0.0
    %179 = vmatprep.subr.mxu0 0.0
    %180 = vmatpush1.msra.mxu0 0.0
    %181 = vmatprep.subr.mxu0 0.0
    %182 = vmatpush1.msra.mxu0 0.0
    %183 = vmatprep.subr.mxu0 0.0
    %184 = vmatpush1.msra.mxu0 0.0
    %185 = vmatprep.subr.mxu0 0.0
    %186 = vmatpush1.msra.mxu0 0.0
    %187 = vmatprep.subr.mxu0 0.0
    %188 = vmatpush1.msra.mxu0 0.0
    %189 = vmatprep.subr.mxu0 0.0
    %190 = vmatpush1.msra.mxu0 0.0
    %191 = vmatprep.subr.mxu0 0.0
    %192 = vmatpush1.msra.mxu0 0.0
    %193 = vmatprep.subr.mxu0 0.0
    %194 = vmatpush1.msra.mxu0 0.0
    %195 = vmatprep.subr.mxu0 0.0
    %196 = vmatpush1.msra.mxu0 0.0
    %197 = vmatprep.subr.mxu0 0.0
    %198 = vmatpush1.msra.mxu0 0.0
    %199 = vmatprep.mubr.f32.mxu0 0.0
    %200 = vmatmul.mubr.f32.gmra.mrb[0].mxu0 %v65
    %v201 = vpop.f32.mrb[0].mxu0
    %v202 = vadd.f32 0.0, %v201
    %v203 = vpop.f32.mrb[0].mxu0
    %v204 = vadd.f32 0.0, %v203
    %205 = vdwg.mxu0
    %206 = vmatprep.subr.mxu0 %v74
    %207 = vmatpush1.msra.mxu0 %v73
    %208 = vmatprep.subr.mxu0 %v78
    %209 = vmatpush1.msra.mxu0 %v77
    %210 = vmatprep.subr.mxu0 %v82
    %211 = vmatpush1.msra.mxu0 %v81
    %212 = vmatprep.subr.mxu0 %v86
    %213 = vmatpush1.msra.mxu0 %v85
    %214 = vmatprep.subr.mxu0 %v90
    %215 = vmatpush1.msra.mxu0 %v89
    %216 = vmatprep.subr.mxu0 %v94
    %217 = vmatpush1.msra.mxu0 %v93
    %218 = vmatprep.subr.mxu0 %v98
    %219 = vmatpush1.msra.mxu0 %v97
    %220 = vmatprep.subr.mxu0 %v102
    %221 = vmatpush1.msra.mxu0 %v101
    %222 = vmatprep.subr.mxu0 %v106
    %223 = vmatpush1.msra.mxu0 %v105
    %224 = vmatprep.subr.mxu0 %v110
    %225 = vmatpush1.msra.mxu0 %v109
    %226 = vmatprep.subr.mxu0 %v114
    %227 = vmatpush1.msra.mxu0 %v113
    %228 = vmatprep.subr.mxu0 %v118
    %229 = vmatpush1.msra.mxu0 %v117
    %230 = vmatprep.subr.mxu0 %v122
    %231 = vmatpush1.msra.mxu0 %v121
    %232 = vmatprep.subr.mxu0 %v126
    %233 = vmatpush1.msra.mxu0 %v125
    %234 = vmatprep.subr.mxu0 %v130
    %235 = vmatpush1.msra.mxu0 %v129
    %236 = vmatprep.subr.mxu0 %v134
    %237 = vmatpush1.msra.mxu0 %v133
    %238 = vmatprep.subr.mxu0 0.0
    %239 = vmatpush1.msra.mxu0 0.0
    %240 = vmatprep.subr.mxu0 0.0
    %241 = vmatpush1.msra.mxu0 0.0
    %242 = vmatprep.subr.mxu0 0.0
    %243 = vmatpush1.msra.mxu0 0.0
    %244 = vmatprep.subr.mxu0 0.0
    %245 = vmatpush1.msra.mxu0 0.0
    %246 = vmatprep.subr.mxu0 0.0
    %247 = vmatpush1.msra.mxu0 0.0
    %248 = vmatprep.subr.mxu0 0.0
    %249 = vmatpush1.msra.mxu0 0.0
    %250 = vmatprep.subr.mxu0 0.0
    %251 = vmatpush1.msra.mxu0 0.0
    %252 = vmatprep.subr.mxu0 0.0
    %253 = vmatpush1.msra.mxu0 0.0
    %254 = vmatprep.subr.mxu0 0.0
    %255 = vmatpush1.msra.mxu0 0.0
    %256 = vmatprep.subr.mxu0 0.0
    %257 = vmatpush1.msra.mxu0 0.0
    %258 = vmatprep.subr.mxu0 0.0
    %259 = vmatpush1.msra.mxu0 0.0
    %260 = vmatprep.subr.mxu0 0.0
    %261 = vmatpush1.msra.mxu0 0.0
    %262 = vmatprep.subr.mxu0 0.0
    %263 = vmatpush1.msra.mxu0 0.0
    %264 = vmatprep.subr.mxu0 0.0
    %265 = vmatpush1.msra.mxu0 0.0
    %266 = vmatprep.subr.mxu0 0.0
    %267 = vmatpush1.msra.mxu0 0.0
    %268 = vmatprep.subr.mxu0 0.0
    %269 = vmatpush1.msra.mxu0 0.0
    %270 = vmatprep.mubr.f32.mxu0 0.0
    %271 = vmatmul.mubr.f32.gmra.mrb[0].mxu0 %v65
    %v272 = vpop.f32.mrb[0].mxu0
    %v273 = vadd.f32 0.0, %v272
    %v274 = vpop.f32.mrb[0].mxu0
    %v275 = vadd.f32 0.0, %v274
    %276 = vdwg.mxu0
    %v277 = vadd.f32 %v67, %v202
    %v278 = vadd.f32 %v68, %v204
    %v279 = vadd.f32 %v69, %v273
    %v280 = vadd.f32 %v70, %v275
    %v281 = vxor.u32 %v277, 2147483648
    %v282 = vmul.f32 %v281, 1.442695
    %v283 = vpow.pop %v282
    %v284 = vadd.f32 %v283, 1.0
    %v285 = vrcp.pop %v284
    %v286 = vmul.f32 1.0, %v285
    %v287 = vxor.u32 %v278, 2147483648
    %v288 = vmul.f32 %v287, 1.442695
    %v289 = vpow.pop %v288
    %v290 = vadd.f32 %v289, 1.0
    %v291 = vrcp.pop %v290
    %v292 = vmul.f32 1.0, %v291
    %v293 = vtanh.pop %v279
    %v294 = vxor.u32 %v280, 2147483648
    %v295 = vmul.f32 %v294, 1.442695
    %v296 = vpow.pop %v295
    %v297 = vadd.f32 %v296, 1.0
    %v298 = vrcp.pop %v297
    %v299 = vmul.f32 1.0, %v298
    %v300 = vmul.f32 %v292, %v66
    %v301 = vmul.f32 %v286, %v293
    %v302 = vadd.f32 %v300, %v301
    %v303 = vtanh.pop %v302
    %v304 = vmul.f32 %v299, %v303
    %s305 = scalar_lea.vmem [#allocation4], 32
    %v306 = vld [vmem:[%s305] sm:$0xff]
    %v307 = vld [vmem:[%s305 + $0x8] sm:$0xff]
    %v308 = vld [vmem:[%s305 + $0x10] sm:$0xff]
    %v309 = vld [vmem:[%s305 + $0x18] sm:$0xff]
    %310 = vmatprep.subr.mxu0 %v72
    %311 = vmatpush1.msra.mxu0 %v71
    %312 = vmatprep.subr.mxu0 %v76
    %313 = vmatpush1.msra.mxu0 %v75
    %314 = vmatprep.subr.mxu0 %v80
    %315 = vmatpush1.msra.mxu0 %v79
    %316 = vmatprep.subr.mxu0 %v84
    %317 = vmatpush1.msra.mxu0 %v83
    %318 = vmatprep.subr.mxu0 %v88
    %319 = vmatpush1.msra.mxu0 %v87
    %320 = vmatprep.subr.mxu0 %v92
    %321 = vmatpush1.msra.mxu0 %v91
    %322 = vmatprep.subr.mxu0 %v96
    %323 = vmatpush1.msra.mxu0 %v95
    %324 = vmatprep.subr.mxu0 %v100
    %325 = vmatpush1.msra.mxu0 %v99
    %326 = vmatprep.subr.mxu0 %v104
    %327 = vmatpush1.msra.mxu0 %v103
    %328 = vmatprep.subr.mxu0 %v108
    %329 = vmatpush1.msra.mxu0 %v107
    %330 = vmatprep.subr.mxu0 %v112
    %331 = vmatpush1.msra.mxu0 %v111
    %332 = vmatprep.subr.mxu0 %v116
    %333 = vmatpush1.msra.mxu0 %v115
    %334 = vmatprep.subr.mxu0 %v120
    %335 = vmatpush1.msra.mxu0 %v119
    %336 = vmatprep.subr.mxu0 %v124
    %337 = vmatpush1.msra.mxu0 %v123
    %338 = vmatprep.subr.mxu0 %v128
    %339 = vmatpush1.msra.mxu0 %v127
    %340 = vmatprep.subr.mxu0 %v132
    %341 = vmatpush1.msra.mxu0 %v131
    %342 = vmatprep.subr.mxu0 0.0
    %343 = vmatpush1.msra.mxu0 0.0
    %344 = vmatprep.subr.mxu0 0.0
    %345 = vmatpush1.msra.mxu0 0.0
    %346 = vmatprep.subr.mxu0 0.0
    %347 = vmatpush1.msra.mxu0 0.0
    %348 = vmatprep.subr.mxu0 0.0
    %349 = vmatpush1.msra.mxu0 0.0
    %350 = vmatprep.subr.mxu0 0.0
    %351 = vmatpush1.msra.mxu0 0.0
    %352 = vmatprep.subr.mxu0 0.0
    %353 = vmatpush1.msra.mxu0 0.0
    %354 = vmatprep.subr.mxu0 0.0
    %355 = vmatpush1.msra.mxu0 0.0
    %356 = vmatprep.subr.mxu0 0.0
    %357 = vmatpush1.msra.mxu0 0.0
    %358 = vmatprep.subr.mxu0 0.0
    %359 = vmatpush1.msra.mxu0 0.0
    %360 = vmatprep.subr.mxu0 0.0
    %361 = vmatpush1.msra.mxu0 0.0
    %362 = vmatprep.subr.mxu0 0.0
    %363 = vmatpush1.msra.mxu0 0.0
    %364 = vmatprep.subr.mxu0 0.0
    %365 = vmatpush1.msra.mxu0 0.0
    %366 = vmatprep.subr.mxu0 0.0
    %367 = vmatpush1.msra.mxu0 0.0
    %368 = vmatprep.subr.mxu0 0.0
    %369 = vmatpush1.msra.mxu0 0.0
    %370 = vmatprep.subr.mxu0 0.0
    %371 = vmatpush1.msra.mxu0 0.0
    %372 = vmatprep.subr.mxu0 0.0
    %373 = vmatpush1.msra.mxu0 0.0
    %374 = vmatprep.mubr.f32.mxu0 0.0
    %375 = vmatmul.mubr.f32.gmra.mrb[0].mxu0 %v304
    %v376 = vpop.f32.mrb[0].mxu0
    %v377 = vadd.f32 0.0, %v376
    %v378 = vpop.f32.mrb[0].mxu0
    %v379 = vadd.f32 0.0, %v378
    %380 = vdwg.mxu0
    %381 = vmatprep.subr.mxu0 %v74
    %382 = vmatpush1.msra.mxu0 %v73
    %383 = vmatprep.subr.mxu0 %v78
    %384 = vmatpush1.msra.mxu0 %v77
    %385 = vmatprep.subr.mxu0 %v82
    %386 = vmatpush1.msra.mxu0 %v81
    %387 = vmatprep.subr.mxu0 %v86
    %388 = vmatpush1.msra.mxu0 %v85
    %389 = vmatprep.subr.mxu0 %v90
    %390 = vmatpush1.msra.mxu0 %v89
    %391 = vmatprep.subr.mxu0 %v94
    %392 = vmatpush1.msra.mxu0 %v93
    %393 = vmatprep.subr.mxu0 %v98
    %394 = vmatpush1.msra.mxu0 %v97
    %395 = vmatprep.subr.mxu0 %v102
    %396 = vmatpush1.msra.mxu0 %v101
    %397 = vmatprep.subr.mxu0 %v106
    %398 = vmatpush1.msra.mxu0 %v105
    %399 = vmatprep.subr.mxu0 %v110
    %400 = vmatpush1.msra.mxu0 %v109
    %401 = vmatprep.subr.mxu0 %v114
    %402 = vmatpush1.msra.mxu0 %v113
    %403 = vmatprep.subr.mxu0 %v118
    %404 = vmatpush1.msra.mxu0 %v117
    %405 = vmatprep.subr.mxu0 %v122
    %406 = vmatpush1.msra.mxu0 %v121
    %407 = vmatprep.subr.mxu0 %v126
    %408 = vmatpush1.msra.mxu0 %v125
    %409 = vmatprep.subr.mxu0 %v130
    %410 = vmatpush1.msra.mxu0 %v129
    %411 = vmatprep.subr.mxu0 %v134
    %412 = vmatpush1.msra.mxu0 %v133
    %413 = vmatprep.subr.mxu0 0.0
    %414 = vmatpush1.msra.mxu0 0.0
    %415 = vmatprep.subr.mxu0 0.0
    %416 = vmatpush1.msra.mxu0 0.0
    %417 = vmatprep.subr.mxu0 0.0
    %418 = vmatpush1.msra.mxu0 0.0
    %419 = vmatprep.subr.mxu0 0.0
    %420 = vmatpush1.msra.mxu0 0.0
    %421 = vmatprep.subr.mxu0 0.0
    %422 = vmatpush1.msra.mxu0 0.0
    %423 = vmatprep.subr.mxu0 0.0
    %424 = vmatpush1.msra.mxu0 0.0
    %425 = vmatprep.subr.mxu0 0.0
    %426 = vmatpush1.msra.mxu0 0.0
    %427 = vmatprep.subr.mxu0 0.0
    %428 = vmatpush1.msra.mxu0 0.0
    %429 = vmatprep.subr.mxu0 0.0
    %430 = vmatpush1.msra.mxu0 0.0
    %431 = vmatprep.subr.mxu0 0.0
    %432 = vmatpush1.msra.mxu0 0.0
    %433 = vmatprep.subr.mxu0 0.0
    %434 = vmatpush1.msra.mxu0 0.0
    %435 = vmatprep.subr.mxu0 0.0
    %436 = vmatpush1.msra.mxu0 0.0
    %437 = vmatprep.subr.mxu0 0.0
    %438 = vmatpush1.msra.mxu0 0.0
    %439 = vmatprep.subr.mxu0 0.0
    %440 = vmatpush1.msra.mxu0 0.0
    %441 = vmatprep.subr.mxu0 0.0
    %442 = vmatpush1.msra.mxu0 0.0
    %443 = vmatprep.subr.mxu0 0.0
    %444 = vmatpush1.msra.mxu0 0.0
    %445 = vmatprep.mubr.f32.mxu0 0.0
    %446 = vmatmul.mubr.f32.gmra.mrb[0].mxu0 %v304
    %v447 = vpop.f32.mrb[0].mxu0
    %v448 = vadd.f32 0.0, %v447
    %v449 = vpop.f32.mrb[0].mxu0
    %v450 = vadd.f32 0.0, %v449
    %451 = vdwg.mxu0
    %v452 = vadd.f32 %v306, %v377
    %v453 = vadd.f32 %v307, %v379
    %v454 = vadd.f32 %v308, %v448
    %v455 = vadd.f32 %v309, %v450
    %v456 = vxor.u32 %v452, 2147483648
    %v457 = vmul.f32 %v456, 1.442695
    %v458 = vpow.pop %v457
    %v459 = vadd.f32 %v458, 1.0
    %v460 = vrcp.pop %v459
    %v461 = vmul.f32 1.0, %v460
    %v462 = vxor.u32 %v453, 2147483648
    %v463 = vmul.f32 %v462, 1.442695
    %v464 = vpow.pop %v463
    %v465 = vadd.f32 %v464, 1.0
    %v466 = vrcp.pop %v465
    %v467 = vmul.f32 1.0, %v466
    %v468 = vtanh.pop %v454
    %v469 = vxor.u32 %v455, 2147483648
    %v470 = vmul.f32 %v469, 1.442695
    %v471 = vpow.pop %v470
    %v472 = vadd.f32 %v471, 1.0
    %v473 = vrcp.pop %v472
    %v474 = vmul.f32 1.0, %v473
    %v475 = vmul.f32 %v467, %v302
    %v476 = vmul.f32 %v461, %v468
    %v477 = vadd.f32 %v475, %v476
    %v478 = vtanh.pop %v477
    %v479 = vmul.f32 %v474, %v478
    %s480 = scalar_lea.vmem [#allocation4], 64
    %v481 = vld [vmem:[%s480] sm:$0xff]
    %v482 = vld [vmem:[%s480 + $0x8] sm:$0xff]
    %v483 = vld [vmem:[%s480 + $0x10] sm:$0xff]
    %v484 = vld [vmem:[%s480 + $0x18] sm:$0xff]
    %485 = vmatprep.subr.mxu0 %v72
    %486 = vmatpush1.msra.mxu0 %v71
    %487 = vmatprep.subr.mxu0 %v76
    %488 = vmatpush1.msra.mxu0 %v75
    %489 = vmatprep.subr.mxu0 %v80
    %490 = vmatpush1.msra.mxu0 %v79
    %491 = vmatprep.subr.mxu0 %v84
    %492 = vmatpush1.msra.mxu0 %v83
    %493 = vmatprep.subr.mxu0 %v88
    %494 = vmatpush1.msra.mxu0 %v87
    %495 = vmatprep.subr.mxu0 %v92
    %496 = vmatpush1.msra.mxu0 %v91
    %497 = vmatprep.subr.mxu0 %v96
    %498 = vmatpush1.msra.mxu0 %v95
    %499 = vmatprep.subr.mxu0 %v100
    %500 = vmatpush1.msra.mxu0 %v99
    %501 = vmatprep.subr.mxu0 %v104
    %502 = vmatpush1.msra.mxu0 %v103
    %503 = vmatprep.subr.mxu0 %v108
    %504 = vmatpush1.msra.mxu0 %v107
    %505 = vmatprep.subr.mxu0 %v112
    %506 = vmatpush1.msra.mxu0 %v111
    %507 = vmatprep.subr.mxu0 %v116
    %508 = vmatpush1.msra.mxu0 %v115
    %509 = vmatprep.subr.mxu0 %v120
    %510 = vmatpush1.msra.mxu0 %v119
    %511 = vmatprep.subr.mxu0 %v124
    %512 = vmatpush1.msra.mxu0 %v123
    %513 = vmatprep.subr.mxu0 %v128
    %514 = vmatpush1.msra.mxu0 %v127
    %515 = vmatprep.subr.mxu0 %v132
    %516 = vmatpush1.msra.mxu0 %v131
    %517 = vmatprep.subr.mxu0 0.0
    %518 = vmatpush1.msra.mxu0 0.0
    %519 = vmatprep.subr.mxu0 0.0
    %520 = vmatpush1.msra.mxu0 0.0
    %521 = vmatprep.subr.mxu0 0.0
    %522 = vmatpush1.msra.mxu0 0.0
    %523 = vmatprep.subr.mxu0 0.0
    %524 = vmatpush1.msra.mxu0 0.0
    %525 = vmatprep.subr.mxu0 0.0
    %526 = vmatpush1.msra.mxu0 0.0
    %527 = vmatprep.subr.mxu0 0.0
    %528 = vmatpush1.msra.mxu0 0.0
    %529 = vmatprep.subr.mxu0 0.0
    %530 = vmatpush1.msra.mxu0 0.0
    %531 = vmatprep.subr.mxu0 0.0
    %532 = vmatpush1.msra.mxu0 0.0
    %533 = vmatprep.subr.mxu0 0.0
    %534 = vmatpush1.msra.mxu0 0.0
    %535 = vmatprep.subr.mxu0 0.0
    %536 = vmatpush1.msra.mxu0 0.0
    %537 = vmatprep.subr.mxu0 0.0
    %538 = vmatpush1.msra.mxu0 0.0
    %539 = vmatprep.subr.mxu0 0.0
    %540 = vmatpush1.msra.mxu0 0.0
    %541 = vmatprep.subr.mxu0 0.0
    %542 = vmatpush1.msra.mxu0 0.0
    %543 = vmatprep.subr.mxu0 0.0
    %544 = vmatpush1.msra.mxu0 0.0
    %545 = vmatprep.subr.mxu0 0.0
    %546 = vmatpush1.msra.mxu0 0.0
    %547 = vmatprep.subr.mxu0 0.0
    %548 = vmatpush1.msra.mxu0 0.0
    %549 = vmatprep.mubr.f32.mxu0 0.0
    %550 = vmatmul.mubr.f32.gmra.mrb[0].mxu0 %v479
    %v551 = vpop.f32.mrb[0].mxu0
    %v552 = vadd.f32 0.0, %v551
    %v553 = vpop.f32.mrb[0].mxu0
    %v554 = vadd.f32 0.0, %v553
    %555 = vdwg.mxu0
    %556 = vmatprep.subr.mxu0 %v74
    %557 = vmatpush1.msra.mxu0 %v73
    %558 = vmatprep.subr.mxu0 %v78
    %559 = vmatpush1.msra.mxu0 %v77
    %560 = vmatprep.subr.mxu0 %v82
    %561 = vmatpush1.msra.mxu0 %v81
    %562 = vmatprep.subr.mxu0 %v86
    %563 = vmatpush1.msra.mxu0 %v85
    %564 = vmatprep.subr.mxu0 %v90
    %565 = vmatpush1.msra.mxu0 %v89
    %566 = vmatprep.subr.mxu0 %v94
    %567 = vmatpush1.msra.mxu0 %v93
    %568 = vmatprep.subr.mxu0 %v98
    %569 = vmatpush1.msra.mxu0 %v97
    %570 = vmatprep.subr.mxu0 %v102
    %571 = vmatpush1.msra.mxu0 %v101
    %572 = vmatprep.subr.mxu0 %v106
    %573 = vmatpush1.msra.mxu0 %v105
    %574 = vmatprep.subr.mxu0 %v110
    %575 = vmatpush1.msra.mxu0 %v109
    %576 = vmatprep.subr.mxu0 %v114
    %577 = vmatpush1.msra.mxu0 %v113
    %578 = vmatprep.subr.mxu0 %v118
    %579 = vmatpush1.msra.mxu0 %v117
    %580 = vmatprep.subr.mxu0 %v122
    %581 = vmatpush1.msra.mxu0 %v121
    %582 = vmatprep.subr.mxu0 %v126
    %583 = vmatpush1.msra.mxu0 %v125
    %584 = vmatprep.subr.mxu0 %v130
    %585 = vmatpush1.msra.mxu0 %v129
    %586 = vmatprep.subr.mxu0 %v134
    %587 = vmatpush1.msra.mxu0 %v133
    %588 = vmatprep.subr.mxu0 0.0
    %589 = vmatpush1.msra.mxu0 0.0
    %590 = vmatprep.subr.mxu0 0.0
    %591 = vmatpush1.msra.mxu0 0.0
    %592 = vmatprep.subr.mxu0 0.0
    %593 = vmatpush1.msra.mxu0 0.0
    %594 = vmatprep.subr.mxu0 0.0
    %595 = vmatpush1.msra.mxu0 0.0
    %596 = vmatprep.subr.mxu0 0.0
    %597 = vmatpush1.msra.mxu0 0.0
    %598 = vmatprep.subr.mxu0 0.0
    %599 = vmatpush1.msra.mxu0 0.0
    %600 = vmatprep.subr.mxu0 0.0
    %601 = vmatpush1.msra.mxu0 0.0
    %602 = vmatprep.subr.mxu0 0.0
    %603 = vmatpush1.msra.mxu0 0.0
    %604 = vmatprep.subr.mxu0 0.0
    %605 = vmatpush1.msra.mxu0 0.0
    %606 = vmatprep.subr.mxu0 0.0
    %607 = vmatpush1.msra.mxu0 0.0
    %608 = vmatprep.subr.mxu0 0.0
    %609 = vmatpush1.msra.mxu0 0.0
    %610 = vmatprep.subr.mxu0 0.0
    %611 = vmatpush1.msra.mxu0 0.0
    %612 = vmatprep.subr.mxu0 0.0
    %613 = vmatpush1.msra.mxu0 0.0
    %614 = vmatprep.subr.mxu0 0.0
    %615 = vmatpush1.msra.mxu0 0.0
    %616 = vmatprep.subr.mxu0 0.0
    %617 = vmatpush1.msra.mxu0 0.0
    %618 = vmatprep.subr.mxu0 0.0
    %619 = vmatpush1.msra.mxu0 0.0
    %620 = vmatprep.mubr.f32.mxu0 0.0
    %621 = vmatmul.mubr.f32.gmra.mrb[0].mxu0 %v479
    %v622 = vpop.f32.mrb[0].mxu0
    %v623 = vadd.f32 0.0, %v622
    %v624 = vpop.f32.mrb[0].mxu0
    %v625 = vadd.f32 0.0, %v624
    %626 = vdwg.mxu0
    %v627 = vadd.f32 %v481, %v552
    %v628 = vadd.f32 %v482, %v554
    %v629 = vadd.f32 %v483, %v623
    %v630 = vadd.f32 %v484, %v625
    %v631 = vxor.u32 %v627, 2147483648
    %v632 = vmul.f32 %v631, 1.442695
    %v633 = vpow.pop %v632
    %v634 = vadd.f32 %v633, 1.0
    %v635 = vrcp.pop %v634
    %v636 = vmul.f32 1.0, %v635
    %v637 = vxor.u32 %v628, 2147483648
    %v638 = vmul.f32 %v637, 1.442695
    %v639 = vpow.pop %v638
    %v640 = vadd.f32 %v639, 1.0
    %v641 = vrcp.pop %v640
    %v642 = vmul.f32 1.0, %v641
    %v643 = vtanh.pop %v629
    %v644 = vxor.u32 %v630, 2147483648
    %v645 = vmul.f32 %v644, 1.442695
    %v646 = vpow.pop %v645
    %v647 = vadd.f32 %v646, 1.0
    %v648 = vrcp.pop %v647
    %v649 = vmul.f32 1.0, %v648
    %v650 = vmul.f32 %v642, %v477
    %v651 = vmul.f32 %v636, %v643
    %v652 = vadd.f32 %v650, %v651
    %v653 = vtanh.pop %v652
    %v654 = vmul.f32 %v649, %v653
    %s655 = scalar_lea.vmem [#allocation4], 96
    %v656 = vld [vmem:[%s655] sm:$0xff]
    %v657 = vld [vmem:[%s655 + $0x8] sm:$0xff]
    %v658 = vld [vmem:[%s655 + $0x10] sm:$0xff]
    %v659 = vld [vmem:[%s655 + $0x18] sm:$0xff]
    %660 = vmatprep.subr.mxu0 %v72
    %661 = vmatpush1.msra.mxu0 %v71
    %662 = vmatprep.subr.mxu0 %v76
    %663 = vmatpush1.msra.mxu0 %v75
    %664 = vmatprep.subr.mxu0 %v80
    %665 = vmatpush1.msra.mxu0 %v79
    %666 = vmatprep.subr.mxu0 %v84
    %667 = vmatpush1.msra.mxu0 %v83
    %668 = vmatprep.subr.mxu0 %v88
    %669 = vmatpush1.msra.mxu0 %v87
    %670 = vmatprep.subr.mxu0 %v92
    %671 = vmatpush1.msra.mxu0 %v91
    %672 = vmatprep.subr.mxu0 %v96
    %673 = vmatpush1.msra.mxu0 %v95
    %674 = vmatprep.subr.mxu0 %v100
    %675 = vmatpush1.msra.mxu0 %v99
    %676 = vmatprep.subr.mxu0 %v104
    %677 = vmatpush1.msra.mxu0 %v103
    %678 = vmatprep.subr.mxu0 %v108
    %679 = vmatpush1.msra.mxu0 %v107
    %680 = vmatprep.subr.mxu0 %v112
    %681 = vmatpush1.msra.mxu0 %v111
    %682 = vmatprep.subr.mxu0 %v116
    %683 = vmatpush1.msra.mxu0 %v115
    %684 = vmatprep.subr.mxu0 %v120
    %685 = vmatpush1.msra.mxu0 %v119
    %686 = vmatprep.subr.mxu0 %v124
    %687 = vmatpush1.msra.mxu0 %v123
    %688 = vmatprep.subr.mxu0 %v128
    %689 = vmatpush1.msra.mxu0 %v127
    %690 = vmatprep.subr.mxu0 %v132
    %691 = vmatpush1.msra.mxu0 %v131
    %692 = vmatprep.subr.mxu0 0.0
    %693 = vmatpush1.msra.mxu0 0.0
    %694 = vmatprep.subr.mxu0 0.0
    %695 = vmatpush1.msra.mxu0 0.0
    %696 = vmatprep.subr.mxu0 0.0
    %697 = vmatpush1.msra.mxu0 0.0
    %698 = vmatprep.subr.mxu0 0.0
    %699 = vmatpush1.msra.mxu0 0.0
    %700 = vmatprep.subr.mxu0 0.0
    %701 = vmatpush1.msra.mxu0 0.0
    %702 = vmatprep.subr.mxu0 0.0
    %703 = vmatpush1.msra.mxu0 0.0
    %704 = vmatprep.subr.mxu0 0.0
    %705 = vmatpush1.msra.mxu0 0.0
    %706 = vmatprep.subr.mxu0 0.0
    %707 = vmatpush1.msra.mxu0 0.0
    %708 = vmatprep.subr.mxu0 0.0
    %709 = vmatpush1.msra.mxu0 0.0
    %710 = vmatprep.subr.mxu0 0.0
    %711 = vmatpush1.msra.mxu0 0.0
    %712 = vmatprep.subr.mxu0 0.0
    %713 = vmatpush1.msra.mxu0 0.0
    %714 = vmatprep.subr.mxu0 0.0
    %715 = vmatpush1.msra.mxu0 0.0
    %716 = vmatprep.subr.mxu0 0.0
    %717 = vmatpush1.msra.mxu0 0.0
    %718 = vmatprep.subr.mxu0 0.0
    %719 = vmatpush1.msra.mxu0 0.0
    %720 = vmatprep.subr.mxu0 0.0
    %721 = vmatpush1.msra.mxu0 0.0
    %722 = vmatprep.subr.mxu0 0.0
    %723 = vmatpush1.msra.mxu0 0.0
    %724 = vmatprep.mubr.f32.mxu0 0.0
    %725 = vmatmul.mubr.f32.gmra.mrb[0].mxu0 %v654
    %v726 = vpop.f32.mrb[0].mxu0
    %v727 = vadd.f32 0.0, %v726
    %v728 = vpop.f32.mrb[0].mxu0
    %v729 = vadd.f32 0.0, %v728
    %730 = vdwg.mxu0
    %731 = vmatprep.subr.mxu0 %v74
    %732 = vmatpush1.msra.mxu0 %v73
    %733 = vmatprep.subr.mxu0 %v78
    %734 = vmatpush1.msra.mxu0 %v77
    %735 = vmatprep.subr.mxu0 %v82
    %736 = vmatpush1.msra.mxu0 %v81
    %737 = vmatprep.subr.mxu0 %v86
    %738 = vmatpush1.msra.mxu0 %v85
    %739 = vmatprep.subr.mxu0 %v90
    %740 = vmatpush1.msra.mxu0 %v89
    %741 = vmatprep.subr.mxu0 %v94
    %742 = vmatpush1.msra.mxu0 %v93
    %743 = vmatprep.subr.mxu0 %v98
    %744 = vmatpush1.msra.mxu0 %v97
    %745 = vmatprep.subr.mxu0 %v102
    %746 = vmatpush1.msra.mxu0 %v101
    %747 = vmatprep.subr.mxu0 %v106
    %748 = vmatpush1.msra.mxu0 %v105
    %749 = vmatprep.subr.mxu0 %v110
    %750 = vmatpush1.msra.mxu0 %v109
    %751 = vmatprep.subr.mxu0 %v114
    %752 = vmatpush1.msra.mxu0 %v113
    %753 = vmatprep.subr.mxu0 %v118
    %754 = vmatpush1.msra.mxu0 %v117
    %755 = vmatprep.subr.mxu0 %v122
    %756 = vmatpush1.msra.mxu0 %v121
    %757 = vmatprep.subr.mxu0 %v126
    %758 = vmatpush1.msra.mxu0 %v125
    %759 = vmatprep.subr.mxu0 %v130
    %760 = vmatpush1.msra.mxu0 %v129
    %761 = vmatprep.subr.mxu0 %v134
    %762 = vmatpush1.msra.mxu0 %v133
    %763 = vmatprep.subr.mxu0 0.0
    %764 = vmatpush1.msra.mxu0 0.0
    %765 = vmatprep.subr.mxu0 0.0
    %766 = vmatpush1.msra.mxu0 0.0
    %767 = vmatprep.subr.mxu0 0.0
    %768 = vmatpush1.msra.mxu0 0.0
    %769 = vmatprep.subr.mxu0 0.0
    %770 = vmatpush1.msra.mxu0 0.0
    %771 = vmatprep.subr.mxu0 0.0
    %772 = vmatpush1.msra.mxu0 0.0
    %773 = vmatprep.subr.mxu0 0.0
    %774 = vmatpush1.msra.mxu0 0.0
    %775 = vmatprep.subr.mxu0 0.0
    %776 = vmatpush1.msra.mxu0 0.0
    %777 = vmatprep.subr.mxu0 0.0
    %778 = vmatpush1.msra.mxu0 0.0
    %779 = vmatprep.subr.mxu0 0.0
    %780 = vmatpush1.msra.mxu0 0.0
    %781 = vmatprep.subr.mxu0 0.0
    %782 = vmatpush1.msra.mxu0 0.0
    %783 = vmatprep.subr.mxu0 0.0
    %784 = vmatpush1.msra.mxu0 0.0
    %785 = vmatprep.subr.mxu0 0.0
    %786 = vmatpush1.msra.mxu0 0.0
    %787 = vmatprep.subr.mxu0 0.0
    %788 = vmatpush1.msra.mxu0 0.0
    %789 = vmatprep.subr.mxu0 0.0
    %790 = vmatpush1.msra.mxu0 0.0
    %791 = vmatprep.subr.mxu0 0.0
    %792 = vmatpush1.msra.mxu0 0.0
    %793 = vmatprep.subr.mxu0 0.0
    %794 = vmatpush1.msra.mxu0 0.0
    %795 = vmatprep.mubr.f32.mxu0 0.0
    %796 = vmatmul.mubr.f32.gmra.mrb[0].mxu0 %v654
    %v797 = vpop.f32.mrb[0].mxu0
    %v798 = vadd.f32 0.0, %v797
    %v799 = vpop.f32.mrb[0].mxu0
    %v800 = vadd.f32 0.0, %v799
    %801 = vdwg.mxu0
    %v802 = vadd.f32 %v656, %v727
    %v803 = vadd.f32 %v657, %v729
    %v804 = vadd.f32 %v658, %v798
    %v805 = vadd.f32 %v659, %v800
    %v806 = vxor.u32 %v802, 2147483648
    %v807 = vmul.f32 %v806, 1.442695
    %v808 = vpow.pop %v807
    %v809 = vadd.f32 %v808, 1.0
    %v810 = vrcp.pop %v809
    %v811 = vmul.f32 1.0, %v810
    %v812 = vxor.u32 %v803, 2147483648
    %v813 = vmul.f32 %v812, 1.442695
    %v814 = vpow.pop %v813
    %v815 = vadd.f32 %v814, 1.0
    %v816 = vrcp.pop %v815
    %v817 = vmul.f32 1.0, %v816
    %v818 = vtanh.pop %v804
    %v819 = vxor.u32 %v805, 2147483648
    %v820 = vmul.f32 %v819, 1.442695
    %v821 = vpow.pop %v820
    %v822 = vadd.f32 %v821, 1.0
    %v823 = vrcp.pop %v822
    %v824 = vmul.f32 1.0, %v823
    %v825 = vmul.f32 %v817, %v652
    %v826 = vmul.f32 %v811, %v818
    %v827 = vadd.f32 %v825, %v826
    %v828 = vtanh.pop %v827
    %v829 = vmul.f32 %v824, %v828
    %s830 = scalar_lea.vmem [#allocation4], 128
    %v831 = vld [vmem:[%s830] sm:$0xff]
    %v832 = vld [vmem:[%s830 + $0x8] sm:$0xff]
    %v833 = vld [vmem:[%s830 + $0x10] sm:$0xff]
    %v834 = vld [vmem:[%s830 + $0x18] sm:$0xff]
    %835 = vmatprep.subr.mxu0 %v72
    %836 = vmatpush1.msra.mxu0 %v71
    %837 = vmatprep.subr.mxu0 %v76
    %838 = vmatpush1.msra.mxu0 %v75
    %839 = vmatprep.subr.mxu0 %v80
    %840 = vmatpush1.msra.mxu0 %v79
    %841 = vmatprep.subr.mxu0 %v84
    %842 = vmatpush1.msra.mxu0 %v83
    %843 = vmatprep.subr.mxu0 %v88
    %844 = vmatpush1.msra.mxu0 %v87
    %845 = vmatprep.subr.mxu0 %v92
    %846 = vmatpush1.msra.mxu0 %v91
    %847 = vmatprep.subr.mxu0 %v96
    %848 = vmatpush1.msra.mxu0 %v95
    %849 = vmatprep.subr.mxu0 %v100
    %850 = vmatpush1.msra.mxu0 %v99
    %851 = vmatprep.subr.mxu0 %v104
    %852 = vmatpush1.msra.mxu0 %v103
    %853 = vmatprep.subr.mxu0 %v108
    %854 = vmatpush1.msra.mxu0 %v107
    %855 = vmatprep.subr.mxu0 %v112
    %856 = vmatpush1.msra.mxu0 %v111
    %857 = vmatprep.subr.mxu0 %v116
    %858 = vmatpush1.msra.mxu0 %v115
    %859 = vmatprep.subr.mxu0 %v120
    %860 = vmatpush1.msra.mxu0 %v119
    %861 = vmatprep.subr.mxu0 %v124
    %862 = vmatpush1.msra.mxu0 %v123
    %863 = vmatprep.subr.mxu0 %v128
    %864 = vmatpush1.msra.mxu0 %v127
    %865 = vmatprep.subr.mxu0 %v132
    %866 = vmatpush1.msra.mxu0 %v131
    %867 = vmatprep.subr.mxu0 0.0
    %868 = vmatpush1.msra.mxu0 0.0
    %869 = vmatprep.subr.mxu0 0.0
    %870 = vmatpush1.msra.mxu0 0.0
    %871 = vmatprep.subr.mxu0 0.0
    %872 = vmatpush1.msra.mxu0 0.0
    %873 = vmatprep.subr.mxu0 0.0
    %874 = vmatpush1.msra.mxu0 0.0
    %875 = vmatprep.subr.mxu0 0.0
    %876 = vmatpush1.msra.mxu0 0.0
    %877 = vmatprep.subr.mxu0 0.0
    %878 = vmatpush1.msra.mxu0 0.0
    %879 = vmatprep.subr.mxu0 0.0
    %880 = vmatpush1.msra.mxu0 0.0
    %881 = vmatprep.subr.mxu0 0.0
    %882 = vmatpush1.msra.mxu0 0.0
    %883 = vmatprep.subr.mxu0 0.0
    %884 = vmatpush1.msra.mxu0 0.0
    %885 = vmatprep.subr.mxu0 0.0
    %886 = vmatpush1.msra.mxu0 0.0
    %887 = vmatprep.subr.mxu0 0.0
    %888 = vmatpush1.msra.mxu0 0.0
    %889 = vmatprep.subr.mxu0 0.0
    %890 = vmatpush1.msra.mxu0 0.0
    %891 = vmatprep.subr.mxu0 0.0
    %892 = vmatpush1.msra.mxu0 0.0
    %893 = vmatprep.subr.mxu0 0.0
    %894 = vmatpush1.msra.mxu0 0.0
    %895 = vmatprep.subr.mxu0 0.0
    %896 = vmatpush1.msra.mxu0 0.0
    %897 = vmatprep.subr.mxu0 0.0
    %898 = vmatpush1.msra.mxu0 0.0
    %899 = vmatprep.mubr.f32.mxu0 0.0
    %900 = vmatmul.mubr.f32.gmra.mrb[0].mxu0 %v829
    %v901 = vpop.f32.mrb[0].mxu0
    %v902 = vadd.f32 0.0, %v901
    %v903 = vpop.f32.mrb[0].mxu0
    %v904 = vadd.f32 0.0, %v903
    %905 = vdwg.mxu0
    %906 = vmatprep.subr.mxu0 %v74
    %907 = vmatpush1.msra.mxu0 %v73
    %908 = vmatprep.subr.mxu0 %v78
    %909 = vmatpush1.msra.mxu0 %v77
    %910 = vmatprep.subr.mxu0 %v82
    %911 = vmatpush1.msra.mxu0 %v81
    %912 = vmatprep.subr.mxu0 %v86
    %913 = vmatpush1.msra.mxu0 %v85
    %914 = vmatprep.subr.mxu0 %v90
    %915 = vmatpush1.msra.mxu0 %v89
    %916 = vmatprep.subr.mxu0 %v94
    %917 = vmatpush1.msra.mxu0 %v93
    %918 = vmatprep.subr.mxu0 %v98
    %919 = vmatpush1.msra.mxu0 %v97
    %920 = vmatprep.subr.mxu0 %v102
    %921 = vmatpush1.msra.mxu0 %v101
    %922 = vmatprep.subr.mxu0 %v106
    %923 = vmatpush1.msra.mxu0 %v105
    %924 = vmatprep.subr.mxu0 %v110
    %925 = vmatpush1.msra.mxu0 %v109
    %926 = vmatprep.subr.mxu0 %v114
    %927 = vmatpush1.msra.mxu0 %v113
    %928 = vmatprep.subr.mxu0 %v118
    %929 = vmatpush1.msra.mxu0 %v117
    %930 = vmatprep.subr.mxu0 %v122
    %931 = vmatpush1.msra.mxu0 %v121
    %932 = vmatprep.subr.mxu0 %v126
    %933 = vmatpush1.msra.mxu0 %v125
    %934 = vmatprep.subr.mxu0 %v130
    %935 = vmatpush1.msra.mxu0 %v129
    %936 = vmatprep.subr.mxu0 %v134
    %937 = vmatpush1.msra.mxu0 %v133
    %938 = vmatprep.subr.mxu0 0.0
    %939 = vmatpush1.msra.mxu0 0.0
    %940 = vmatprep.subr.mxu0 0.0
    %941 = vmatpush1.msra.mxu0 0.0
    %942 = vmatprep.subr.mxu0 0.0
    %943 = vmatpush1.msra.mxu0 0.0
    %944 = vmatprep.subr.mxu0 0.0
    %945 = vmatpush1.msra.mxu0 0.0
    %946 = vmatprep.subr.mxu0 0.0
    %947 = vmatpush1.msra.mxu0 0.0
    %948 = vmatprep.subr.mxu0 0.0
    %949 = vmatpush1.msra.mxu0 0.0
    %950 = vmatprep.subr.mxu0 0.0
    %951 = vmatpush1.msra.mxu0 0.0
    %952 = vmatprep.subr.mxu0 0.0
    %953 = vmatpush1.msra.mxu0 0.0
    %954 = vmatprep.subr.mxu0 0.0
    %955 = vmatpush1.msra.mxu0 0.0
    %956 = vmatprep.subr.mxu0 0.0
    %957 = vmatpush1.msra.mxu0 0.0
    %958 = vmatprep.subr.mxu0 0.0
    %959 = vmatpush1.msra.mxu0 0.0
    %960 = vmatprep.subr.mxu0 0.0
    %961 = vmatpush1.msra.mxu0 0.0
    %962 = vmatprep.subr.mxu0 0.0
    %963 = vmatpush1.msra.mxu0 0.0
    %964 = vmatprep.subr.mxu0 0.0
    %965 = vmatpush1.msra.mxu0 0.0
    %966 = vmatprep.subr.mxu0 0.0
    %967 = vmatpush1.msra.mxu0 0.0
    %968 = vmatprep.subr.mxu0 0.0
    %969 = vmatpush1.msra.mxu0 0.0
    %970 = vmatprep.mubr.f32.mxu0 0.0
    %971 = vmatmul.mubr.f32.gmra.mrb[0].mxu0 %v829
    %v972 = vpop.f32.mrb[0].mxu0
    %v973 = vadd.f32 0.0, %v972
    %v974 = vpop.f32.mrb[0].mxu0
    %v975 = vadd.f32 0.0, %v974
    %976 = vdwg.mxu0
    %v977 = vadd.f32 %v831, %v902
    %v978 = vadd.f32 %v832, %v904
    %v979 = vadd.f32 %v833, %v973
    %v980 = vadd.f32 %v834, %v975
    %v981 = vxor.u32 %v977, 2147483648
    %v982 = vmul.f32 %v981, 1.442695
    %v983 = vpow.pop %v982
    %v984 = vadd.f32 %v983, 1.0
    %v985 = vrcp.pop %v984
    %v986 = vmul.f32 1.0, %v985
    %v987 = vxor.u32 %v978, 2147483648
    %v988 = vmul.f32 %v987, 1.442695
    %v989 = vpow.pop %v988
    %v990 = vadd.f32 %v989, 1.0
    %v991 = vrcp.pop %v990
    %v992 = vmul.f32 1.0, %v991
    %v993 = vtanh.pop %v979
    %v994 = vxor.u32 %v980, 2147483648
    %v995 = vmul.f32 %v994, 1.442695
    %v996 = vpow.pop %v995
    %v997 = vadd.f32 %v996, 1.0
    %v998 = vrcp.pop %v997
    %v999 = vmul.f32 1.0, %v998
    %v1000 = vmul.f32 %v992, %v827
    %v1001 = vmul.f32 %v986, %v993
    %v1002 = vadd.f32 %v1000, %v1001
    %v1003 = vtanh.pop %v1002
    %v1004 = vmul.f32 %v999, %v1003
    %s1005 = scalar_lea.vmem [#allocation4], 160
    %v1006 = vld [vmem:[%s1005] sm:$0xff]
    %v1007 = vld [vmem:[%s1005 + $0x8] sm:$0xff]
    %v1008 = vld [vmem:[%s1005 + $0x10] sm:$0xff]
    %v1009 = vld [vmem:[%s1005 + $0x18] sm:$0xff]
    %1010 = vmatprep.subr.mxu0 %v72
    %1011 = vmatpush1.msra.mxu0 %v71
    %1012 = vmatprep.subr.mxu0 %v76
    %1013 = vmatpush1.msra.mxu0 %v75
    %1014 = vmatprep.subr.mxu0 %v80
    %1015 = vmatpush1.msra.mxu0 %v79
    %1016 = vmatprep.subr.mxu0 %v84
    %1017 = vmatpush1.msra.mxu0 %v83
    %1018 = vmatprep.subr.mxu0 %v88
    %1019 = vmatpush1.msra.mxu0 %v87
    %1020 = vmatprep.subr.mxu0 %v92
    %1021 = vmatpush1.msra.mxu0 %v91
    %1022 = vmatprep.subr.mxu0 %v96
    %1023 = vmatpush1.msra.mxu0 %v95
    %1024 = vmatprep.subr.mxu0 %v100
    %1025 = vmatpush1.msra.mxu0 %v99
    %1026 = vmatprep.subr.mxu0 %v104
    %1027 = vmatpush1.msra.mxu0 %v103
    %1028 = vmatprep.subr.mxu0 %v108
    %1029 = vmatpush1.msra.mxu0 %v107
    %1030 = vmatprep.subr.mxu0 %v112
    %1031 = vmatpush1.msra.mxu0 %v111
    %1032 = vmatprep.subr.mxu0 %v116
    %1033 = vmatpush1.msra.mxu0 %v115
    %1034 = vmatprep.subr.mxu0 %v120
    %1035 = vmatpush1.msra.mxu0 %v119
    %1036 = vmatprep.subr.mxu0 %v124
    %1037 = vmatpush1.msra.mxu0 %v123
    %1038 = vmatprep.subr.mxu0 %v128
    %1039 = vmatpush1.msra.mxu0 %v127
    %1040 = vmatprep.subr.mxu0 %v132
    %1041 = vmatpush1.msra.mxu0 %v131
    %1042 = vmatprep.subr.mxu0 0.0
    %1043 = vmatpush1.msra.mxu0 0.0
    %1044 = vmatprep.subr.mxu0 0.0
    %1045 = vmatpush1.msra.mxu0 0.0
    %1046 = vmatprep.subr.mxu0 0.0
    %1047 = vmatpush1.msra.mxu0 0.0
    %1048 = vmatprep.subr.mxu0 0.0
    %1049 = vmatpush1.msra.mxu0 0.0
    %1050 = vmatprep.subr.mxu0 0.0
    %1051 = vmatpush1.msra.mxu0 0.0
    %1052 = vmatprep.subr.mxu0 0.0
    %1053 = vmatpush1.msra.mxu0 0.0
    %1054 = vmatprep.subr.mxu0 0.0
    %1055 = vmatpush1.msra.mxu0 0.0
    %1056 = vmatprep.subr.mxu0 0.0
    %1057 = vmatpush1.msra.mxu0 0.0
    %1058 = vmatprep.subr.mxu0 0.0
    %1059 = vmatpush1.msra.mxu0 0.0
    %1060 = vmatprep.subr.mxu0 0.0
    %1061 = vmatpush1.msra.mxu0 0.0
    %1062 = vmatprep.subr.mxu0 0.0
    %1063 = vmatpush1.msra.mxu0 0.0
    %1064 = vmatprep.subr.mxu0 0.0
    %1065 = vmatpush1.msra.mxu0 0.0
    %1066 = vmatprep.subr.mxu0 0.0
    %1067 = vmatpush1.msra.mxu0 0.0
    %1068 = vmatprep.subr.mxu0 0.0
    %1069 = vmatpush1.msra.mxu0 0.0
    %1070 = vmatprep.subr.mxu0 0.0
    %1071 = vmatpush1.msra.mxu0 0.0
    %1072 = vmatprep.subr.mxu0 0.0
    %1073 = vmatpush1.msra.mxu0 0.0
    %1074 = vmatprep.mubr.f32.mxu0 0.0
    %1075 = vmatmul.mubr.f32.gmra.mrb[0].mxu0 %v1004
    %v1076 = vpop.f32.mrb[0].mxu0
    %v1077 = vadd.f32 0.0, %v1076
    %v1078 = vpop.f32.mrb[0].mxu0
    %v1079 = vadd.f32 0.0, %v1078
    %1080 = vdwg.mxu0
    %1081 = vmatprep.subr.mxu0 %v74
    %1082 = vmatpush1.msra.mxu0 %v73
    %1083 = vmatprep.subr.mxu0 %v78
    %1084 = vmatpush1.msra.mxu0 %v77
    %1085 = vmatprep.subr.mxu0 %v82
    %1086 = vmatpush1.msra.mxu0 %v81
    %1087 = vmatprep.subr.mxu0 %v86
    %1088 = vmatpush1.msra.mxu0 %v85
    %1089 = vmatprep.subr.mxu0 %v90
    %1090 = vmatpush1.msra.mxu0 %v89
    %1091 = vmatprep.subr.mxu0 %v94
    %1092 = vmatpush1.msra.mxu0 %v93
    %1093 = vmatprep.subr.mxu0 %v98
    %1094 = vmatpush1.msra.mxu0 %v97
    %1095 = vmatprep.subr.mxu0 %v102
    %1096 = vmatpush1.msra.mxu0 %v101
    %1097 = vmatprep.subr.mxu0 %v106
    %1098 = vmatpush1.msra.mxu0 %v105
    %1099 = vmatprep.subr.mxu0 %v110
    %1100 = vmatpush1.msra.mxu0 %v109
    %1101 = vmatprep.subr.mxu0 %v114
    %1102 = vmatpush1.msra.mxu0 %v113
    %1103 = vmatprep.subr.mxu0 %v118
    %1104 = vmatpush1.msra.mxu0 %v117
    %1105 = vmatprep.subr.mxu0 %v122
    %1106 = vmatpush1.msra.mxu0 %v121
    %1107 = vmatprep.subr.mxu0 %v126
    %1108 = vmatpush1.msra.mxu0 %v125
    %1109 = vmatprep.subr.mxu0 %v130
    %1110 = vmatpush1.msra.mxu0 %v129
    %1111 = vmatprep.subr.mxu0 %v134
    %1112 = vmatpush1.msra.mxu0 %v133
    %1113 = vmatprep.subr.mxu0 0.0
    %1114 = vmatpush1.msra.mxu0 0.0
    %1115 = vmatprep.subr.mxu0 0.0
    %1116 = vmatpush1.msra.mxu0 0.0
    %1117 = vmatprep.subr.mxu0 0.0
    %1118 = vmatpush1.msra.mxu0 0.0
    %1119 = vmatprep.subr.mxu0 0.0
    %1120 = vmatpush1.msra.mxu0 0.0
    %1121 = vmatprep.subr.mxu0 0.0
    %1122 = vmatpush1.msra.mxu0 0.0
    %1123 = vmatprep.subr.mxu0 0.0
    %1124 = vmatpush1.msra.mxu0 0.0
    %1125 = vmatprep.subr.mxu0 0.0
    %1126 = vmatpush1.msra.mxu0 0.0
    %1127 = vmatprep.subr.mxu0 0.0
    %1128 = vmatpush1.msra.mxu0 0.0
    %1129 = vmatprep.subr.mxu0 0.0
    %1130 = vmatpush1.msra.mxu0 0.0
    %1131 = vmatprep.subr.mxu0 0.0
    %1132 = vmatpush1.msra.mxu0 0.0
    %1133 = vmatprep.subr.mxu0 0.0
    %1134 = vmatpush1.msra.mxu0 0.0
    %1135 = vmatprep.subr.mxu0 0.0
    %1136 = vmatpush1.msra.mxu0 0.0
    %1137 = vmatprep.subr.mxu0 0.0
    %1138 = vmatpush1.msra.mxu0 0.0
    %1139 = vmatprep.subr.mxu0 0.0
    %1140 = vmatpush1.msra.mxu0 0.0
    %1141 = vmatprep.subr.mxu0 0.0
    %1142 = vmatpush1.msra.mxu0 0.0
    %1143 = vmatprep.subr.mxu0 0.0
    %1144 = vmatpush1.msra.mxu0 0.0
    %1145 = vmatprep.mubr.f32.mxu0 0.0
    %1146 = vmatmul.mubr.f32.gmra.mrb[0].mxu0 %v1004
    %v1147 = vpop.f32.mrb[0].mxu0
    %v1148 = vadd.f32 0.0, %v1147
    %v1149 = vpop.f32.mrb[0].mxu0
    %v1150 = vadd.f32 0.0, %v1149
    %1151 = vdwg.mxu0
    %v1152 = vadd.f32 %v1006, %v1077
    %v1153 = vadd.f32 %v1007, %v1079
    %v1154 = vadd.f32 %v1008, %v1148
    %v1155 = vadd.f32 %v1009, %v1150
    %v1156 = vxor.u32 %v1152, 2147483648
    %v1157 = vmul.f32 %v1156, 1.442695
    %v1158 = vpow.pop %v1157
    %v1159 = vadd.f32 %v1158, 1.0
    %v1160 = vrcp.pop %v1159
    %v1161 = vmul.f32 1.0, %v1160
    %v1162 = vxor.u32 %v1153, 2147483648
    %v1163 = vmul.f32 %v1162, 1.442695
    %v1164 = vpow.pop %v1163
    %v1165 = vadd.f32 %v1164, 1.0
    %v1166 = vrcp.pop %v1165
    %v1167 = vmul.f32 1.0, %v1166
    %v1168 = vtanh.pop %v1154
    %v1169 = vxor.u32 %v1155, 2147483648
    %v1170 = vmul.f32 %v1169, 1.442695
    %v1171 = vpow.pop %v1170
    %v1172 = vadd.f32 %v1171, 1.0
    %v1173 = vrcp.pop %v1172
    %v1174 = vmul.f32 1.0, %v1173
    %v1175 = vmul.f32 %v1167, %v1002
    %v1176 = vmul.f32 %v1161, %v1168
    %v1177 = vadd.f32 %v1175, %v1176
    %v1178 = vtanh.pop %v1177
    %v1179 = vmul.f32 %v1174, %v1178
    %s1180 = scalar_lea.vmem [#allocation4], 192
    %v1181 = vld [vmem:[%s1180] sm:$0xff]
    %v1182 = vld [vmem:[%s1180 + $0x8] sm:$0xff]
    %v1183 = vld [vmem:[%s1180 + $0x10] sm:$0xff]
    %v1184 = vld [vmem:[%s1180 + $0x18] sm:$0xff]
    %1185 = vmatprep.subr.mxu0 %v72
    %1186 = vmatpush1.msra.mxu0 %v71
    %1187 = vmatprep.subr.mxu0 %v76
    %1188 = vmatpush1.msra.mxu0 %v75
    %1189 = vmatprep.subr.mxu0 %v80
    %1190 = vmatpush1.msra.mxu0 %v79
    %1191 = vmatprep.subr.mxu0 %v84
    %1192 = vmatpush1.msra.mxu0 %v83
    %1193 = vmatprep.subr.mxu0 %v88
    %1194 = vmatpush1.msra.mxu0 %v87
    %1195 = vmatprep.subr.mxu0 %v92
    %1196 = vmatpush1.msra.mxu0 %v91
    %1197 = vmatprep.subr.mxu0 %v96
    %1198 = vmatpush1.msra.mxu0 %v95
    %1199 = vmatprep.subr.mxu0 %v100
    %1200 = vmatpush1.msra.mxu0 %v99
    %1201 = vmatprep.subr.mxu0 %v104
    %1202 = vmatpush1.msra.mxu0 %v103
    %1203 = vmatprep.subr.mxu0 %v108
    %1204 = vmatpush1.msra.mxu0 %v107
    %1205 = vmatprep.subr.mxu0 %v112
    %1206 = vmatpush1.msra.mxu0 %v111
    %1207 = vmatprep.subr.mxu0 %v116
    %1208 = vmatpush1.msra.mxu0 %v115
    %1209 = vmatprep.subr.mxu0 %v120
    %1210 = vmatpush1.msra.mxu0 %v119
    %1211 = vmatprep.subr.mxu0 %v124
    %1212 = vmatpush1.msra.mxu0 %v123
    %1213 = vmatprep.subr.mxu0 %v128
    %1214 = vmatpush1.msra.mxu0 %v127
    %1215 = vmatprep.subr.mxu0 %v132
    %1216 = vmatpush1.msra.mxu0 %v131
    %1217 = vmatprep.subr.mxu0 0.0
    %1218 = vmatpush1.msra.mxu0 0.0
    %1219 = vmatprep.subr.mxu0 0.0
    %1220 = vmatpush1.msra.mxu0 0.0
    %1221 = vmatprep.subr.mxu0 0.0
    %1222 = vmatpush1.msra.mxu0 0.0
    %1223 = vmatprep.subr.mxu0 0.0
    %1224 = vmatpush1.msra.mxu0 0.0
    %1225 = vmatprep.subr.mxu0 0.0
    %1226 = vmatpush1.msra.mxu0 0.0
    %1227 = vmatprep.subr.mxu0 0.0
    %1228 = vmatpush1.msra.mxu0 0.0
    %1229 = vmatprep.subr.mxu0 0.0
    %1230 = vmatpush1.msra.mxu0 0.0
    %1231 = vmatprep.subr.mxu0 0.0
    %1232 = vmatpush1.msra.mxu0 0.0
    %1233 = vmatprep.subr.mxu0 0.0
    %1234 = vmatpush1.msra.mxu0 0.0
    %1235 = vmatprep.subr.mxu0 0.0
    %1236 = vmatpush1.msra.mxu0 0.0
    %1237 = vmatprep.subr.mxu0 0.0
    %1238 = vmatpush1.msra.mxu0 0.0
    %1239 = vmatprep.subr.mxu0 0.0
    %1240 = vmatpush1.msra.mxu0 0.0
    %1241 = vmatprep.subr.mxu0 0.0
    %1242 = vmatpush1.msra.mxu0 0.0
    %1243 = vmatprep.subr.mxu0 0.0
    %1244 = vmatpush1.msra.mxu0 0.0
    %1245 = vmatprep.subr.mxu0 0.0
    %1246 = vmatpush1.msra.mxu0 0.0
    %1247 = vmatprep.subr.mxu0 0.0
    %1248 = vmatpush1.msra.mxu0 0.0
    %1249 = vmatprep.mubr.f32.mxu0 0.0
    %1250 = vmatmul.mubr.f32.gmra.mrb[0].mxu0 %v1179
    %v1251 = vpop.f32.mrb[0].mxu0
    %v1252 = vadd.f32 0.0, %v1251
    %v1253 = vpop.f32.mrb[0].mxu0
    %v1254 = vadd.f32 0.0, %v1253
    %1255 = vdwg.mxu0
    %1256 = vmatprep.subr.mxu0 %v74
    %1257 = vmatpush1.msra.mxu0 %v73
    %1258 = vmatprep.subr.mxu0 %v78
    %1259 = vmatpush1.msra.mxu0 %v77
    %1260 = vmatprep.subr.mxu0 %v82
    %1261 = vmatpush1.msra.mxu0 %v81
    %1262 = vmatprep.subr.mxu0 %v86
    %1263 = vmatpush1.msra.mxu0 %v85
    %1264 = vmatprep.subr.mxu0 %v90
    %1265 = vmatpush1.msra.mxu0 %v89
    %1266 = vmatprep.subr.mxu0 %v94
    %1267 = vmatpush1.msra.mxu0 %v93
    %1268 = vmatprep.subr.mxu0 %v98
    %1269 = vmatpush1.msra.mxu0 %v97
    %1270 = vmatprep.subr.mxu0 %v102
    %1271 = vmatpush1.msra.mxu0 %v101
    %1272 = vmatprep.subr.mxu0 %v106
    %1273 = vmatpush1.msra.mxu0 %v105
    %1274 = vmatprep.subr.mxu0 %v110
    %1275 = vmatpush1.msra.mxu0 %v109
    %1276 = vmatprep.subr.mxu0 %v114
    %1277 = vmatpush1.msra.mxu0 %v113
    %1278 = vmatprep.subr.mxu0 %v118
    %1279 = vmatpush1.msra.mxu0 %v117
    %1280 = vmatprep.subr.mxu0 %v122
    %1281 = vmatpush1.msra.mxu0 %v121
    %1282 = vmatprep.subr.mxu0 %v126
    %1283 = vmatpush1.msra.mxu0 %v125
    %1284 = vmatprep.subr.mxu0 %v130
    %1285 = vmatpush1.msra.mxu0 %v129
    %1286 = vmatprep.subr.mxu0 %v134
    %1287 = vmatpush1.msra.mxu0 %v133
    %1288 = vmatprep.subr.mxu0 0.0
    %1289 = vmatpush1.msra.mxu0 0.0
    %1290 = vmatprep.subr.mxu0 0.0
    %1291 = vmatpush1.msra.mxu0 0.0
    %1292 = vmatprep.subr.mxu0 0.0
    %1293 = vmatpush1.msra.mxu0 0.0
    %1294 = vmatprep.subr.mxu0 0.0
    %1295 = vmatpush1.msra.mxu0 0.0
    %1296 = vmatprep.subr.mxu0 0.0
    %1297 = vmatpush1.msra.mxu0 0.0
    %1298 = vmatprep.subr.mxu0 0.0
    %1299 = vmatpush1.msra.mxu0 0.0
    %1300 = vmatprep.subr.mxu0 0.0
    %1301 = vmatpush1.msra.mxu0 0.0
    %1302 = vmatprep.subr.mxu0 0.0
    %1303 = vmatpush1.msra.mxu0 0.0
    %1304 = vmatprep.subr.mxu0 0.0
    %1305 = vmatpush1.msra.mxu0 0.0
    %1306 = vmatprep.subr.mxu0 0.0
    %1307 = vmatpush1.msra.mxu0 0.0
    %1308 = vmatprep.subr.mxu0 0.0
    %1309 = vmatpush1.msra.mxu0 0.0
    %1310 = vmatprep.subr.mxu0 0.0
    %1311 = vmatpush1.msra.mxu0 0.0
    %1312 = vmatprep.subr.mxu0 0.0
    %1313 = vmatpush1.msra.mxu0 0.0
    %1314 = vmatprep.subr.mxu0 0.0
    %1315 = vmatpush1.msra.mxu0 0.0
    %1316 = vmatprep.subr.mxu0 0.0
    %1317 = vmatpush1.msra.mxu0 0.0
    %1318 = vmatprep.subr.mxu0 0.0
    %1319 = vmatpush1.msra.mxu0 0.0
    %1320 = vmatprep.mubr.f32.mxu0 0.0
    %1321 = vmatmul.mubr.f32.gmra.mrb[0].mxu0 %v1179
    %v1322 = vpop.f32.mrb[0].mxu0
    %v1323 = vadd.f32 0.0, %v1322
    %v1324 = vpop.f32.mrb[0].mxu0
    %v1325 = vadd.f32 0.0, %v1324
    %1326 = vdwg.mxu0
    %v1327 = vadd.f32 %v1181, %v1252
    %v1328 = vadd.f32 %v1182, %v1254
    %v1329 = vadd.f32 %v1183, %v1323
    %v1330 = vadd.f32 %v1184, %v1325
    %v1331 = vxor.u32 %v1327, 2147483648
    %v1332 = vmul.f32 %v1331, 1.442695
    %v1333 = vpow.pop %v1332
    %v1334 = vadd.f32 %v1333, 1.0
    %v1335 = vrcp.pop %v1334
    %v1336 = vmul.f32 1.0, %v1335
    %v1337 = vxor.u32 %v1328, 2147483648
    %v1338 = vmul.f32 %v1337, 1.442695
    %v1339 = vpow.pop %v1338
    %v1340 = vadd.f32 %v1339, 1.0
    %v1341 = vrcp.pop %v1340
    %v1342 = vmul.f32 1.0, %v1341
    %v1343 = vtanh.pop %v1329
    %v1344 = vxor.u32 %v1330, 2147483648
    %v1345 = vmul.f32 %v1344, 1.442695
    %v1346 = vpow.pop %v1345
    %v1347 = vadd.f32 %v1346, 1.0
    %v1348 = vrcp.pop %v1347
    %v1349 = vmul.f32 1.0, %v1348
    %v1350 = vmul.f32 %v1342, %v1177
    %v1351 = vmul.f32 %v1336, %v1343
    %v1352 = vadd.f32 %v1350, %v1351
    %v1353 = vtanh.pop %v1352
    %v1354 = vmul.f32 %v1349, %v1353
    %s1355 = scalar_lea.vmem [#allocation4], 224
    %v1356 = vld [vmem:[%s1355] sm:$0xff]
    %v1357 = vld [vmem:[%s1355 + $0x8] sm:$0xff]
    %v1358 = vld [vmem:[%s1355 + $0x10] sm:$0xff]
    %v1359 = vld [vmem:[%s1355 + $0x18] sm:$0xff]
    %1360 = vmatprep.subr.mxu0 %v72
    %1361 = vmatpush1.msra.mxu0 %v71
    %1362 = vmatprep.subr.mxu0 %v76
    %1363 = vmatpush1.msra.mxu0 %v75
    %1364 = vmatprep.subr.mxu0 %v80
    %1365 = vmatpush1.msra.mxu0 %v79
    %1366 = vmatprep.subr.mxu0 %v84
    %1367 = vmatpush1.msra.mxu0 %v83
    %1368 = vmatprep.subr.mxu0 %v88
    %1369 = vmatpush1.msra.mxu0 %v87
    %1370 = vmatprep.subr.mxu0 %v92
    %1371 = vmatpush1.msra.mxu0 %v91
    %1372 = vmatprep.subr.mxu0 %v96
    %1373 = vmatpush1.msra.mxu0 %v95
    %1374 = vmatprep.subr.mxu0 %v100
    %1375 = vmatpush1.msra.mxu0 %v99
    %1376 = vmatprep.subr.mxu0 %v104
    %1377 = vmatpush1.msra.mxu0 %v103
    %1378 = vmatprep.subr.mxu0 %v108
    %1379 = vmatpush1.msra.mxu0 %v107
    %1380 = vmatprep.subr.mxu0 %v112
    %1381 = vmatpush1.msra.mxu0 %v111
    %1382 = vmatprep.subr.mxu0 %v116
    %1383 = vmatpush1.msra.mxu0 %v115
    %1384 = vmatprep.subr.mxu0 %v120
    %1385 = vmatpush1.msra.mxu0 %v119
    %1386 = vmatprep.subr.mxu0 %v124
    %1387 = vmatpush1.msra.mxu0 %v123
    %1388 = vmatprep.subr.mxu0 %v128
    %1389 = vmatpush1.msra.mxu0 %v127
    %1390 = vmatprep.subr.mxu0 %v132
    %1391 = vmatpush1.msra.mxu0 %v131
    %1392 = vmatprep.subr.mxu0 0.0
    %1393 = vmatpush1.msra.mxu0 0.0
    %1394 = vmatprep.subr.mxu0 0.0
    %1395 = vmatpush1.msra.mxu0 0.0
    %1396 = vmatprep.subr.mxu0 0.0
    %1397 = vmatpush1.msra.mxu0 0.0
    %1398 = vmatprep.subr.mxu0 0.0
    %1399 = vmatpush1.msra.mxu0 0.0
    %1400 = vmatprep.subr.mxu0 0.0
    %1401 = vmatpush1.msra.mxu0 0.0
    %1402 = vmatprep.subr.mxu0 0.0
    %1403 = vmatpush1.msra.mxu0 0.0
    %1404 = vmatprep.subr.mxu0 0.0
    %1405 = vmatpush1.msra.mxu0 0.0
    %1406 = vmatprep.subr.mxu0 0.0
    %1407 = vmatpush1.msra.mxu0 0.0
    %1408 = vmatprep.subr.mxu0 0.0
    %1409 = vmatpush1.msra.mxu0 0.0
    %1410 = vmatprep.subr.mxu0 0.0
    %1411 = vmatpush1.msra.mxu0 0.0
    %1412 = vmatprep.subr.mxu0 0.0
    %1413 = vmatpush1.msra.mxu0 0.0
    %1414 = vmatprep.subr.mxu0 0.0
    %1415 = vmatpush1.msra.mxu0 0.0
    %1416 = vmatprep.subr.mxu0 0.0
    %1417 = vmatpush1.msra.mxu0 0.0
    %1418 = vmatprep.subr.mxu0 0.0
    %1419 = vmatpush1.msra.mxu0 0.0
    %1420 = vmatprep.subr.mxu0 0.0
    %1421 = vmatpush1.msra.mxu0 0.0
    %1422 = vmatprep.subr.mxu0 0.0
    %1423 = vmatpush1.msra.mxu0 0.0
    %1424 = vmatprep.mubr.f32.mxu0 0.0
    %1425 = vmatmul.mubr.f32.gmra.mrb[0].mxu0 %v1354
    %v1426 = vpop.f32.mrb[0].mxu0
    %v1427 = vadd.f32 0.0, %v1426
    %v1428 = vpop.f32.mrb[0].mxu0
    %v1429 = vadd.f32 0.0, %v1428
    %1430 = vdwg.mxu0
    %1431 = vmatprep.subr.mxu0 %v74
    %1432 = vmatpush1.msra.mxu0 %v73
    %1433 = vmatprep.subr.mxu0 %v78
    %1434 = vmatpush1.msra.mxu0 %v77
    %1435 = vmatprep.subr.mxu0 %v82
    %1436 = vmatpush1.msra.mxu0 %v81
    %1437 = vmatprep.subr.mxu0 %v86
    %1438 = vmatpush1.msra.mxu0 %v85
    %1439 = vmatprep.subr.mxu0 %v90
    %1440 = vmatpush1.msra.mxu0 %v89
    %1441 = vmatprep.subr.mxu0 %v94
    %1442 = vmatpush1.msra.mxu0 %v93
    %1443 = vmatprep.subr.mxu0 %v98
    %1444 = vmatpush1.msra.mxu0 %v97
    %1445 = vmatprep.subr.mxu0 %v102
    %1446 = vmatpush1.msra.mxu0 %v101
    %1447 = vmatprep.subr.mxu0 %v106
    %1448 = vmatpush1.msra.mxu0 %v105
    %1449 = vmatprep.subr.mxu0 %v110
    %1450 = vmatpush1.msra.mxu0 %v109
    %1451 = vmatprep.subr.mxu0 %v114
    %1452 = vmatpush1.msra.mxu0 %v113
    %1453 = vmatprep.subr.mxu0 %v118
    %1454 = vmatpush1.msra.mxu0 %v117
    %1455 = vmatprep.subr.mxu0 %v122
    %1456 = vmatpush1.msra.mxu0 %v121
    %1457 = vmatprep.subr.mxu0 %v126
    %1458 = vmatpush1.msra.mxu0 %v125
    %1459 = vmatprep.subr.mxu0 %v130
    %1460 = vmatpush1.msra.mxu0 %v129
    %1461 = vmatprep.subr.mxu0 %v134
    %1462 = vmatpush1.msra.mxu0 %v133
    %1463 = vmatprep.subr.mxu0 0.0
    %1464 = vmatpush1.msra.mxu0 0.0
    %1465 = vmatprep.subr.mxu0 0.0
    %1466 = vmatpush1.msra.mxu0 0.0
    %1467 = vmatprep.subr.mxu0 0.0
    %1468 = vmatpush1.msra.mxu0 0.0
    %1469 = vmatprep.subr.mxu0 0.0
    %1470 = vmatpush1.msra.mxu0 0.0
    %1471 = vmatprep.subr.mxu0 0.0
    %1472 = vmatpush1.msra.mxu0 0.0
    %1473 = vmatprep.subr.mxu0 0.0
    %1474 = vmatpush1.msra.mxu0 0.0
    %1475 = vmatprep.subr.mxu0 0.0
    %1476 = vmatpush1.msra.mxu0 0.0
    %1477 = vmatprep.subr.mxu0 0.0
    %1478 = vmatpush1.msra.mxu0 0.0
    %1479 = vmatprep.subr.mxu0 0.0
    %1480 = vmatpush1.msra.mxu0 0.0
    %1481 = vmatprep.subr.mxu0 0.0
    %1482 = vmatpush1.msra.mxu0 0.0
    %1483 = vmatprep.subr.mxu0 0.0
    %1484 = vmatpush1.msra.mxu0 0.0
    %1485 = vmatprep.subr.mxu0 0.0
    %1486 = vmatpush1.msra.mxu0 0.0
    %1487 = vmatprep.subr.mxu0 0.0
    %1488 = vmatpush1.msra.mxu0 0.0
    %1489 = vmatprep.subr.mxu0 0.0
    %1490 = vmatpush1.msra.mxu0 0.0
    %1491 = vmatprep.subr.mxu0 0.0
    %1492 = vmatpush1.msra.mxu0 0.0
    %1493 = vmatprep.subr.mxu0 0.0
    %1494 = vmatpush1.msra.mxu0 0.0
    %1495 = vmatprep.mubr.f32.mxu0 0.0
    %1496 = vmatmul.mubr.f32.gmra.mrb[0].mxu0 %v1354
    %v1497 = vpop.f32.mrb[0].mxu0
    %v1498 = vadd.f32 0.0, %v1497
    %v1499 = vpop.f32.mrb[0].mxu0
    %v1500 = vadd.f32 0.0, %v1499
    %1501 = vdwg.mxu0
    %v1502 = vadd.f32 %v1356, %v1427
    %v1503 = vadd.f32 %v1357, %v1429
    %v1504 = vadd.f32 %v1358, %v1498
    %v1505 = vadd.f32 %v1359, %v1500
    %v1506 = vxor.u32 %v1502, 2147483648
    %v1507 = vmul.f32 %v1506, 1.442695
    %v1508 = vpow.pop %v1507
    %v1509 = vadd.f32 %v1508, 1.0
    %v1510 = vrcp.pop %v1509
    %v1511 = vmul.f32 1.0, %v1510
    %v1512 = vxor.u32 %v1503, 2147483648
    %v1513 = vmul.f32 %v1512, 1.442695
    %v1514 = vpow.pop %v1513
    %v1515 = vadd.f32 %v1514, 1.0
    %v1516 = vrcp.pop %v1515
    %v1517 = vmul.f32 1.0, %v1516
    %v1518 = vtanh.pop %v1504
    %v1519 = vxor.u32 %v1505, 2147483648
    %v1520 = vmul.f32 %v1519, 1.442695
    %v1521 = vpow.pop %v1520
    %v1522 = vadd.f32 %v1521, 1.0
    %v1523 = vrcp.pop %v1522
    %v1524 = vmul.f32 1.0, %v1523
    %v1525 = vmul.f32 %v1517, %v1352
    %v1526 = vmul.f32 %v1511, %v1518
    %v1527 = vadd.f32 %v1525, %v1526
    %v1528 = vtanh.pop %v1527
    %v1529 = vmul.f32 %v1524, %v1528
    %1530 = vst [vmem:[#allocation2] sm:$0xff] %v1529
    %1531 = vst [vmem:[#allocation3] sm:$0xff] %v1527
    // Predicated region
    $region34: #{tpu_custom_call.1} parent=1 // pred_check
      %p1532 = pneg %p59
    $region35: #{tpu_custom_call.1} parent=1 // pred_check_branch
      %1534 = sbr.rel (%p1532) target = $region37
    $region36: #{tpu_custom_call.1} parent=1 // pred_region
      %v1535 = vld [vmem:[#allocation9] sm:$0xff]
      %v1536 = vld [vmem:[#allocation9 + $0x8] sm:$0xff]
      %v1537 = vld [vmem:[#allocation9 + $0x10] sm:$0xff]
      %v1538 = vld [vmem:[#allocation9 + $0x18] sm:$0xff]
      %v1539 = vld [vmem:[#allocation9 + $0x20] sm:$0xff]
      %v1540 = vld [vmem:[#allocation9 + $0x28] sm:$0xff]
      %v1541 = vld [vmem:[#allocation9 + $0x30] sm:$0xff]
      %v1542 = vld [vmem:[#allocation9 + $0x38] sm:$0xff]
      %v1543 = vld [vmem:[#allocation9 + $0x40] sm:$0xff]
      %v1544 = vld [vmem:[#allocation9 + $0x48] sm:$0xff]
      %v1545 = vld [vmem:[#allocation9 + $0x50] sm:$0xff]
      %v1546 = vld [vmem:[#allocation9 + $0x58] sm:$0xff]
      %v1547 = vld [vmem:[#allocation9 + $0x60] sm:$0xff]
      %v1548 = vld [vmem:[#allocation9 + $0x68] sm:$0xff]
      %v1549 = vld [vmem:[#allocation9 + $0x70] sm:$0xff]
      %v1550 = vld [vmem:[#allocation9 + $0x78] sm:$0xff]
      %v1551 = vld [vmem:[%s3] sm:$0x1]
      %v1553 = vlaneseq
      %v1554 = vshrl.u32 %v1553, 7
      %v1555 = vsub.s32 0, %v1554
      %v1556 = vrot.slane %v1551, %v1555
      %1558 = vmatprep.subr.mxu0 0.0
      %1559 = vmatpush1.msra.mxu0 %v1535
      %1560 = vmatprep.subr.mxu0 0.0
      %1561 = vmatpush1.msra.mxu0 %v1536
      %1562 = vmatprep.subr.mxu0 0.0
      %1563 = vmatpush1.msra.mxu0 %v1537
      %1564 = vmatprep.subr.mxu0 0.0
      %1565 = vmatpush1.msra.mxu0 %v1538
      %1566 = vmatprep.subr.mxu0 0.0
      %1567 = vmatpush1.msra.mxu0 %v1539
      %1568 = vmatprep.subr.mxu0 0.0
      %1569 = vmatpush1.msra.mxu0 %v1540
      %1570 = vmatprep.subr.mxu0 0.0
      %1571 = vmatpush1.msra.mxu0 %v1541
      %1572 = vmatprep.subr.mxu0 0.0
      %1573 = vmatpush1.msra.mxu0 %v1542
      %1574 = vmatprep.subr.mxu0 0.0
      %1575 = vmatpush1.msra.mxu0 %v1543
      %1576 = vmatprep.subr.mxu0 0.0
      %1577 = vmatpush1.msra.mxu0 %v1544
      %1578 = vmatprep.subr.mxu0 0.0
      %1579 = vmatpush1.msra.mxu0 %v1545
      %1580 = vmatprep.subr.mxu0 0.0
      %1581 = vmatpush1.msra.mxu0 %v1546
      %1582 = vmatprep.subr.mxu0 0.0
      %1583 = vmatpush1.msra.mxu0 %v1547
      %1584 = vmatprep.subr.mxu0 0.0
      %1585 = vmatpush1.msra.mxu0 %v1548
      %1586 = vmatprep.subr.mxu0 0.0
      %1587 = vmatpush1.msra.mxu0 %v1549
      %1588 = vmatprep.subr.mxu0 0.0
      %1589 = vmatpush1.msra.mxu0 %v1550
      %1590 = vmatprep.subr.mxu0 0.0
      %1591 = vmatpush1.msra.mxu0 0.0
      %1592 = vmatprep.subr.mxu0 0.0
      %1593 = vmatpush1.msra.mxu0 0.0
      %1594 = vmatprep.subr.mxu0 0.0
      %1595 = vmatpush1.msra.mxu0 0.0
      %1596 = vmatprep.subr.mxu0 0.0
      %1597 = vmatpush1.msra.mxu0 0.0
      %1598 = vmatprep.subr.mxu0 0.0
      %1599 = vmatpush1.msra.mxu0 0.0
      %1600 = vmatprep.subr.mxu0 0.0
      %1601 = vmatpush1.msra.mxu0 0.0
      %1602 = vmatprep.subr.mxu0 0.0
      %1603 = vmatpush1.msra.mxu0 0.0
      %1604 = vmatprep.subr.mxu0 0.0
      %1605 = vmatpush1.msra.mxu0 0.0
      %1606 = vmatprep.subr.mxu0 0.0
      %1607 = vmatpush1.msra.mxu0 0.0
      %1608 = vmatprep.subr.mxu0 0.0
      %1609 = vmatpush1.msra.mxu0 0.0
      %1610 = vmatprep.subr.mxu0 0.0
      %1611 = vmatpush1.msra.mxu0 0.0
      %1612 = vmatprep.subr.mxu0 0.0
      %1613 = vmatpush1.msra.mxu0 0.0
      %1614 = vmatprep.subr.mxu0 0.0
      %1615 = vmatpush1.msra.mxu0 0.0
      %1616 = vmatprep.subr.mxu0 0.0
      %1617 = vmatpush1.msra.mxu0 0.0
      %1618 = vmatprep.subr.mxu0 0.0
      %1619 = vmatpush1.msra.mxu0 0.0
      %1620 = vmatprep.subr.mxu0 0.0
      %1621 = vmatpush1.msra.mxu0 0.0
      %1622 = vmatprep.mubr.f32.mxu0 0.0
      %1623 = vmatmul.mubr.f32.gmra.mrb[0].mxu0 %v1529
      %v1624 = vpop.f32.mrb[0].mxu0
      %v1625 = vadd.f32 %v1556, %v1624
      %v1626 = vpop.f32.mrb[0].mxu0
      %1627 = vdwg.mxu0
      %1628 = vst [vmem:[#allocation10] sm:$0xff] %v1625
    $region37: #{tpu_custom_call.1} parent=1 // pred_fallthru
      _
    // Predicated region
    $region38: #{tpu_custom_call.1} parent=1 // pred_check
      _
    $region39: #{tpu_custom_call.1} parent=1 // pred_check_branch
      %1630 = sbr.rel (0) target = $region41
    $region40: #{tpu_custom_call.1} parent=1 // pred_region
      %s1632 = ssub.s32 128, 128
      %1633 = vsyncadd [#allocation6], %s1632
      %s1635 = sshll.u32 [#allocation10], 4
      %s1636 = int_to_ptr.vmem [resolvable:$true] %s1635
      %1638 = dma.vmem_to_hbm [thread:$0]  %s1636, 128, %s4, [#allocation6]
    $region41: #{tpu_custom_call.1} parent=1 // pred_fallthru
      _
    // Predicated region
    $region42: #{tpu_custom_call.1} parent=1 // pred_check
      _
    $region43: #{tpu_custom_call.1} parent=1 // pred_check_branch
      %1640 = sbr.rel (0) target = $region45
    $region44: #{tpu_custom_call.1} parent=1 // pred_region
      %1641 = dma.done [#allocation6], 128
    $region45: #{tpu_custom_call.1} parent=1 // pred_fallthru
      _
    %1642 = vsyncpa [#allocation5], 1
    %1643 = vsyncpa [#allocation8], 1
    %1644 = vsyncpa [#allocation6], 1

</llo_original>
